<compile_context>
chip_gen: v7x
topology: tpu7x:2x2x1
jax: 0.10.0
libtpu: 0.0.40
codegen_flags: <defaults>
</compile_context>

<pallas_src>
import functools

import jax
import jax.numpy as jnp
from jax.experimental import pallas as pl
from jax.experimental.pallas import tpu as pltpu

_MiB = 1024 * 1024


def _round_up(n, m):
    return (n + m - 1) // m * m


@functools.lru_cache(maxsize=1)
def _tpu_config():
    """Best-effort, generation-aware tiling / VMEM parameters."""
    vmem_cap = None
    try:
        vmem_cap = int(pltpu.get_tpu_info().vmem_capacity_bytes)
    except Exception:
        vmem_cap = None
    kind = ""
    try:
        kind = jax.devices()[0].device_kind.lower()
    except Exception:
        pass
    # 128x128-MXU generations (v2..v5) vs 256x256 (v6e, v7x).
    small_mxu = any(t in kind for t in ("v2", "v3", "v4", "v5"))
    is_v7x = ("v7" in kind) or (vmem_cap is not None and vmem_cap <= 64 * _MiB)
    if vmem_cap is None:
        vmem_cap = 64 * _MiB if is_v7x else 128 * _MiB
    return {
        # Leave headroom for compiler scratch and in-kernel f32 temporaries:
        # ~3/4 of physical, never above 100 MiB (=> 48 MiB v7x, ~96 MiB v5e/v6e).
        "vmem_cap_limit": int(min(100 * _MiB, (3 * vmem_cap) // 4)),
        "lane_multiple": 128 if small_mxu else 256,
        "tb_cap": 128 if small_mxu else 256,
        "two_tensorcores": is_v7x,
    }


# ---------------------------------------------------------------------------
# Kernel: fused GRU cell on one batch tile.
#   x    : [TB, Ip]    (compute dtype, bf16 by default)
#   h    : [TB, Hp]
#   wx3  : [Ip, 3*Hp]  columns [Wu_x | Wr_x | Wo_x]
#   wh2  : [Hp, 2*Hp]  columns [Wu_h | Wr_h]
#   woh  : [Hp, Hp]    candidate-gate h-side weights
#   b3   : [1,  3*Hp]  fused biases [bu | br | bo] (f32)
#   out  : [TB, Hp]
# ---------------------------------------------------------------------------
def _gru_cell_kernel(x_ref, h_ref, wx3_ref, wh2_ref, woh_ref, b3_ref, out_ref):
    hp = out_ref.shape[-1]

    x = x_ref[...]
    h = h_ref[...]

    # Independent wide matmuls first: MXU stays busy ahead of the EUP sigmoids.
    gx = jnp.dot(x, wx3_ref[...], preferred_element_type=jnp.float32) + b3_ref[...]
    gh = jnp.dot(h, wh2_ref[...], preferred_element_type=jnp.float32)

    hf = h.astype(jnp.float32)

    u_pre = gx[:, 0:hp] + gh[:, 0:hp]
    r_pre = gx[:, hp:2 * hp] + gh[:, hp:2 * hp]
    o_x = gx[:, 2 * hp:3 * hp]          # x-side candidate pre-act (bias included)

    update = jax.nn.sigmoid(u_pre)
    reset = jax.nn.sigmoid(r_pre)

    # Only the truly dependent matmul sits after the sigmoid.
    hr = (hf * reset).astype(woh_ref.dtype)
    o_pre = o_x + jnp.dot(hr, woh_ref[...], preferred_element_type=jnp.float32)
    cand = jnp.tanh(o_pre)

    new_state = hf * (1.0 - update) + cand * update
    out_ref[...] = new_state.astype(out_ref.dtype)


# ---------------------------------------------------------------------------
# One-time weight packing (call once at init, NOT per timestep).
# ---------------------------------------------------------------------------
def pack_params(params, input_size, hidden_size, compute_dtype=jnp.bfloat16,
                lane_multiple=None):
    I, H = input_size, hidden_size
    if lane_multiple is None:
        lane_multiple = _tpu_config()["lane_multiple"]
    Hp = _round_up(H, lane_multiple)     # lane-dense hidden (128 or 256 per gen)
    Ip = _round_up(I, 8)                 # sublane-align the x contraction dim
    dtype = jnp.dtype(compute_dtype)

    def split(w):
        wt = jnp.asarray(w, jnp.float32).T          # [I+H, H]
        return wt[:I, :], wt[I:, :]

    wux, wuh = split(params["wu"])
    wrx, wrh = split(params["wr"])
    wox, woh = split(params["wo"])

    def pad_to(w, rows, cols):
        out = jnp.zeros((rows, cols), jnp.float32)
        return out.at[:w.shape[0], :w.shape[1]].set(w).astype(dtype)

    wx3 = jnp.concatenate(
        [pad_to(wux, Ip, Hp), pad_to(wrx, Ip, Hp), pad_to(wox, Ip, Hp)], axis=1)
    wh2 = jnp.concatenate([pad_to(wuh, Hp, Hp), pad_to(wrh, Hp, Hp)], axis=1)
    wohp = pad_to(woh, Hp, Hp)

    b3 = jnp.zeros((1, 3 * Hp), jnp.float32)
    b3 = b3.at[0, 0:H].set(params["bu"].astype(jnp.float32))
    b3 = b3.at[0, Hp:Hp + H].set(params["br"].astype(jnp.float32))
    b3 = b3.at[0, 2 * Hp:2 * Hp + H].set(params["bo"].astype(jnp.float32))

    return {
        "wx3": wx3, "wh2": wh2, "woh": wohp, "b3": b3,
        "input_size": I, "input_pad": Ip,
        "hidden_size": H, "hidden_pad": Hp,
    }


# ---------------------------------------------------------------------------
# Wrapper: batch-tiled pallas_call with VMEM-resident, single-buffered weights.
# ---------------------------------------------------------------------------
def conv_gru_cell(x, prev_state, packed, *, return_padded_state=False):
    """Fused ConvGRUCell forward.

    x: [B, I]; prev_state: [B, H], padded [B_pad, Hp], or None.
    Returns [B, H]; with return_padded_state=True returns the padded
    [B_pad, Hp] state (cheap carry across a time loop, no pad/slice per step).
    """
    cfg = _tpu_config()
    B, I = x.shape
    H, Hp = packed["hidden_size"], packed["hidden_pad"]
    Ip = packed["input_pad"]
    wx3, wh2, woh, b3 = packed["wx3"], packed["wh2"], packed["woh"], packed["b3"]
    cd = wx3.dtype                       # MXU compute dtype (bf16 by default)
    out_dtype = x.dtype

    # --- batch tiling -------------------------------------------------------
    SUB = 16                             # bf16 sublane multiple (covers f32's 8)
    tb_cap = cfg["tb_cap"]               # 128 on 128x128-MXU chips, else 256
    min_tiles = 2 if (cfg["two_tensorcores"] and B >= 2 * SUB) else 1
    n_tiles = max(min_tiles, pl.cdiv(B, tb_cap))
    TB = _round_up(pl.cdiv(B, n_tiles), SUB)
    B_pad = TB * n_tiles

    # --- cast + pad activations (lane/sublane dense, zero-padded) -----------
    xc = x.astype(cd)
    if (B_pad, Ip) != (B, I):
        xc = jnp.zeros((B_pad, Ip), cd).at[:B, :I].set(xc)

    if prev_state is None:
        h = jnp.zeros((B_pad, Hp), cd)
    else:
        h = prev_state.astype(cd)
        if h.shape != (B_pad, Hp):
            h = jnp.zeros((B_pad, Hp), cd).at[:h.shape[0], :h.shape[1]].set(h)

    # --- VMEM budget / cost hint ---------------------------------------------
    csize = jnp.dtype(cd).itemsize
    osize = jnp.dtype(out_dtype).itemsize
    weight_bytes = sum(int(a.size) * a.dtype.itemsize for a in (wx3, wh2, woh, b3))
    act_bytes = 2 * TB * (Ip + Hp) * csize + 2 * TB * Hp * osize  # dbl-buffered tiles
    temp_bytes = 8 * TB * Hp * 4                                   # f32 gx/gh/hf/...
    vmem_limit = int(min(cfg["vmem_cap_limit"],
                         max(int(1.25 * (weight_bytes + act_bytes + temp_bytes)),
                             32 * _MiB)))

    cost = pl.CostEstimate(
        flops=2 * B_pad * (Ip * 3 * Hp + Hp * 2 * Hp + Hp * Hp),
        transcendentals=4 * B_pad * Hp,
        bytes_accessed=weight_bytes + B_pad * (Ip + Hp) * csize + B_pad * Hp * osize,
    )

    def _call(weight_pipeline_mode):
        def wspec(shape):
            if weight_pipeline_mode is None:
                return pl.BlockSpec(shape, lambda i: (0, 0))
            return pl.BlockSpec(shape, lambda i: (0, 0),
                                pipeline_mode=weight_pipeline_mode)

        return pl.pallas_call(
            _gru_cell_kernel,
            out_shape=jax.ShapeDtypeStruct((B_pad, Hp), out_dtype),
            grid_spec=pltpu.PrefetchScalarGridSpec(
                num_scalar_prefetch=0,
                grid=(B_pad // TB,),
                in_specs=[
                    pl.BlockSpec((TB, Ip), lambda i: (i, 0)),   # x batch tile
                    pl.BlockSpec((TB, Hp), lambda i: (i, 0)),   # h batch tile
                    wspec((Ip, 3 * Hp)),                        # fused x-side weights
                    wspec((Hp, 2 * Hp)),                        # fused h-side (u, r)
                    wspec((Hp, Hp)),                            # candidate h-side
                    wspec((1, 3 * Hp)),                         # fused biases
                ],
                out_specs=pl.BlockSpec((TB, Hp), lambda i: (i, 0)),
            ),
            compiler_params=pltpu.CompilerParams(
                dimension_semantics=("parallel",),
                vmem_limit_bytes=vmem_limit,
            ),
            cost_estimate=cost,
        )(xc, h, wx3, wh2, woh, b3)

    try:
        # Constant-index weight blocks: single-buffer (nothing to prefetch).
        out = _call(pl.Buffered(1))
    except Exception:
        out = _call(None)   # fallback if pipeline_mode/Buffered(1) is unsupported

    if return_padded_state:
        return out
    return out[:B, :H]


# ---------------------------------------------------------------------------
# Init + pure-JAX reference (mirrors the PyTorch module).
# ---------------------------------------------------------------------------
def _orthogonal(key, rows, cols, dtype=jnp.float32):
    """Deterministic orthogonal init matching init.orthogonal_ semantics."""
    n, m = max(rows, cols), min(rows, cols)
    a = jax.random.normal(key, (n, m), dtype=jnp.float32)
    q, r = jnp.linalg.qr(a)
    q = q * jnp.sign(jnp.diagonal(r))[None, :]
    w = q if rows >= cols else q.T
    return w.astype(dtype)


def init_params(key, input_size, hidden_size, dtype=jnp.float32):
    k1, k2, k3 = jax.random.split(key, 3)
    in_feat = input_size + hidden_size
    return {
        "wu": _orthogonal(k1, hidden_size, in_feat, dtype),
        "wr": _orthogonal(k2, hidden_size, in_feat, dtype),
        "wo": _orthogonal(k3, hidden_size, in_feat, dtype),
        "bu": jnp.zeros((hidden_size,), dtype),
        "br": jnp.zeros((hidden_size,), dtype),
        "bo": jnp.zeros((hidden_size,), dtype),
    }


def _reference(x, h, p):
    """Pure-JAX reference of the PyTorch forward (full-precision dots)."""
    hi = jax.lax.Precision.HIGHEST
    stacked = jnp.concatenate([x, h], axis=1)
    update = jax.nn.sigmoid(jnp.dot(stacked, p["wu"].T, precision=hi) + p["bu"])
    reset = jax.nn.sigmoid(jnp.dot(stacked, p["wr"].T, precision=hi) + p["br"])
    out_in = jnp.tanh(
        jnp.dot(jnp.concatenate([x, h * reset], axis=1), p["wo"].T, precision=hi)
        + p["bo"])
    return h * (1.0 - update) + out_in * update


if __name__ == "__main__":
    key = jax.random.PRNGKey(0)

    # Small shapes consistent with the module (flat-feature GRU gates).
    B, I, H = 2, 4, 32
    kx, kh, kp, k2 = jax.random.split(key, 4)

    x = jax.random.normal(kx, (B, I), dtype=jnp.float32)
    prev_state = jax.random.normal(kh, (B, H), dtype=jnp.float32)
    params = init_params(kp, I, H)
    ref = _reference(x, prev_state, params)

    # --- exactness check with f32-packed weights -----------------------------
    packed_f32 = pack_params(params, I, H, compute_dtype=jnp.float32)
    out_f32 = jax.block_until_ready(conv_gru_cell(x, prev_state, packed_f32))
    assert out_f32.shape == (B, H)
    assert jnp.allclose(out_f32, ref, atol=1e-4, rtol=1e-4), "f32 mismatch vs reference"

    # --- default bf16 MXU path (perf path) -----------------------------------
    packed = pack_params(params, I, H)            # bf16 weights by default
    out_bf16 = jax.block_until_ready(conv_gru_cell(x, prev_state, packed))
    assert jnp.allclose(out_bf16, ref, atol=5e-2, rtol=5e-2), "bf16 mismatch vs reference"

    # --- prev_state=None path (zeros init), like the module ------------------
    out0 = jax.block_until_ready(conv_gru_cell(x, None, packed_f32))
    ref0 = _reference(x, jnp.zeros((B, H), jnp.float32), params)
    assert jnp.allclose(out0, ref0, atol=1e-4, rtol=1e-4)

    # --- short sequence carrying the PADDED state (no per-step pad/slice) ----
    T = 3
    xs = jax.random.normal(k2, (T, B, I), dtype=jnp.float32)
    h_pad = None
    for t in range(T):
        h_pad = conv_gru_cell(xs[t], h_pad, packed_f32, return_padded_state=True)
    h_seq = jax.block_until_ready(h_pad)[:B, :H]
    h_ref = jnp.zeros((B, H), jnp.float32)
    for t in range(T):
        h_ref = _reference(xs[t], h_ref, params)
    assert jnp.allclose(h_seq, h_ref, atol=1e-3, rtol=1e-3)

    # --- exercise batch padding / multi-tile grid path -----------------------
    B2 = 40
    kx2, kh2 = jax.random.split(jax.random.PRNGKey(1), 2)
    x2 = jax.random.normal(kx2, (B2, I), dtype=jnp.float32)
    h2 = jax.random.normal(kh2, (B2, H), dtype=jnp.float32)
    out2 = jax.block_until_ready(conv_gru_cell(x2, h2, packed))
    assert out2.shape == (B2, H)
    assert jnp.allclose(out2, _reference(x2, h2, params), atol=5e-2, rtol=5e-2)

    print("KERNEL_OK")
</pallas_src>

<mosaic_0001>
module attributes {stable_mosaic.version = 11 : i64} {
  func.func @_gru_cell_kernel(%arg0: i32, %arg1: memref<16x8xf32, #tpu.memory_space<vmem>>, %arg2: memref<16x256xf32, #tpu.memory_space<vmem>>, %arg3: memref<8x768xf32, #tpu.memory_space<vmem>>, %arg4: memref<256x512xf32, #tpu.memory_space<vmem>>, %arg5: memref<256x256xf32, #tpu.memory_space<vmem>>, %arg6: memref<1x768xf32, #tpu.memory_space<vmem>>, %arg7: memref<16x256xf32, #tpu.memory_space<vmem>>) attributes {dimension_semantics = [#tpu.dimension_semantics<parallel>], iteration_bounds = array<i64: 1>, scalar_prefetch = 0 : i64, scratch_operands = 0 : i64, tpu.core_type = #tpu.core_type<tc>, window_params = [{transform_indices = @transform_0, window_bounds = array<i64: 16, 8>}, {transform_indices = @transform_1, window_bounds = array<i64: 16, 256>}, {pipeline_mode = #tpu.pipeline_mode<synchronous>, transform_indices = @transform_2, window_bounds = array<i64: 8, 768>}, {pipeline_mode = #tpu.pipeline_mode<synchronous>, transform_indices = @transform_3, window_bounds = array<i64: 256, 512>}, {pipeline_mode = #tpu.pipeline_mode<synchronous>, transform_indices = @transform_4, window_bounds = array<i64: 256, 256>}, {pipeline_mode = #tpu.pipeline_mode<synchronous>, transform_indices = @transform_5, window_bounds = array<i64: 1, 768>}, {transform_indices = @transform_6, window_bounds = array<i64: 16, 256>}]} {
    %c0 = arith.constant 0 : index
    %c0_0 = arith.constant 0 : index
    %0 = vector.load %arg1[%c0, %c0_0] : memref<16x8xf32, #tpu.memory_space<vmem>>, vector<16x8xf32>
    %c0_1 = arith.constant 0 : index
    %c0_2 = arith.constant 0 : index
    %1 = vector.load %arg2[%c0_1, %c0_2] : memref<16x256xf32, #tpu.memory_space<vmem>>, vector<16x256xf32>
    %c0_3 = arith.constant 0 : index
    %c0_4 = arith.constant 0 : index
    %2 = vector.load %arg3[%c0_3, %c0_4] : memref<8x768xf32, #tpu.memory_space<vmem>>, vector<8x768xf32>
    %cst = arith.constant dense<0.000000e+00> : vector<16x768xf32>
    %3 = tpu.matmul %0, %2, %cst {dimension_numbers = #tpu.dot_dimension_numbers<[1], [0], [0], [1], [0, 0, 1, 1], [], []>} : vector<16x8xf32>, vector<8x768xf32>, vector<16x768xf32> -> vector<16x768xf32>
    %c0_5 = arith.constant 0 : index
    %c0_6 = arith.constant 0 : index
    %4 = vector.load %arg6[%c0_5, %c0_6] : memref<1x768xf32, #tpu.memory_space<vmem>>, vector<1x768xf32>
    %5 = vector.broadcast %4 : vector<1x768xf32> to vector<16x768xf32>
    %6 = arith.addf %3, %5 : vector<16x768xf32>
    %c0_7 = arith.constant 0 : index
    %c0_8 = arith.constant 0 : index
    %7 = vector.load %arg4[%c0_7, %c0_8] : memref<256x512xf32, #tpu.memory_space<vmem>>, vector<256x512xf32>
    %cst_9 = arith.constant dense<0.000000e+00> : vector<16x512xf32>
    %8 = tpu.matmul %1, %7, %cst_9 {dimension_numbers = #tpu.dot_dimension_numbers<[1], [0], [0], [1], [0, 0, 1, 1], [], []>} : vector<16x256xf32>, vector<256x512xf32>, vector<16x512xf32> -> vector<16x512xf32>
    %9 = vector.extract_strided_slice %6 {offsets = [0, 0], sizes = [16, 256], strides = [1, 1]} : vector<16x768xf32> to vector<16x256xf32>
    %10 = vector.extract_strided_slice %8 {offsets = [0, 0], sizes = [16, 256], strides = [1, 1]} : vector<16x512xf32> to vector<16x256xf32>
    %11 = arith.addf %9, %10 : vector<16x256xf32>
    %12 = vector.extract_strided_slice %6 {offsets = [0, 256], sizes = [16, 256], strides = [1, 1]} : vector<16x768xf32> to vector<16x256xf32>
    %13 = vector.extract_strided_slice %8 {offsets = [0, 256], sizes = [16, 256], strides = [1, 1]} : vector<16x512xf32> to vector<16x256xf32>
    %14 = arith.addf %12, %13 : vector<16x256xf32>
    %15 = vector.extract_strided_slice %6 {offsets = [0, 512], sizes = [16, 256], strides = [1, 1]} : vector<16x768xf32> to vector<16x256xf32>
    %16 = arith.negf %11 : vector<16x256xf32>
    %17 = math.exp %16 : vector<16x256xf32>
    %cst_10 = arith.constant 1.000000e+00 : f32
    %18 = vector.broadcast %cst_10 : f32 to vector<16x256xf32>
    %19 = arith.addf %18, %17 : vector<16x256xf32>
    %20 = arith.divf %18, %19 : vector<16x256xf32>
    %21 = arith.negf %14 : vector<16x256xf32>
    %22 = math.exp %21 : vector<16x256xf32>
    %cst_11 = arith.constant 1.000000e+00 : f32
    %23 = vector.broadcast %cst_11 : f32 to vector<16x256xf32>
    %24 = arith.addf %23, %22 : vector<16x256xf32>
    %25 = arith.divf %23, %24 : vector<16x256xf32>
    %26 = arith.mulf %1, %25 : vector<16x256xf32>
    %c0_12 = arith.constant 0 : index
    %c0_13 = arith.constant 0 : index
    %27 = vector.load %arg5[%c0_12, %c0_13] : memref<256x256xf32, #tpu.memory_space<vmem>>, vector<256x256xf32>
    %cst_14 = arith.constant dense<0.000000e+00> : vector<16x256xf32>
    %28 = tpu.matmul %26, %27, %cst_14 {dimension_numbers = #tpu.dot_dimension_numbers<[1], [0], [0], [1], [0, 0, 1, 1], [], []>} : vector<16x256xf32>, vector<256x256xf32>, vector<16x256xf32> -> vector<16x256xf32>
    %29 = arith.addf %15, %28 : vector<16x256xf32>
    %30 = math.tanh %29 : vector<16x256xf32>
    %cst_15 = arith.constant 1.000000e+00 : f32
    %31 = vector.broadcast %cst_15 : f32 to vector<16x256xf32>
    %32 = arith.subf %31, %20 : vector<16x256xf32>
    %33 = arith.mulf %1, %32 : vector<16x256xf32>
    %34 = arith.mulf %30, %20 : vector<16x256xf32>
    %35 = arith.addf %33, %34 : vector<16x256xf32>
    %c0_16 = arith.constant 0 : index
    %c0_17 = arith.constant 0 : index
    %36 = vector.load %arg7[%c0_16, %c0_17] : memref<16x256xf32, #tpu.memory_space<vmem>>, vector<16x256xf32>
    tpu.vector_store %arg7[%c0_16, %c0_17], %35 {strides = array<i32>} : memref<16x256xf32, #tpu.memory_space<vmem>>, vector<16x256xf32>,
    return
  }
  func.func @transform_0(%arg0: i32) -> (i32, i32) {
    %c0_i32 = arith.constant 0 : i32
    %c0_i32_0 = arith.constant 0 : i32
    return %arg0, %c0_i32 : i32, i32
  }
  func.func @transform_1(%arg0: i32) -> (i32, i32) {
    %c0_i32 = arith.constant 0 : i32
    %c0_i32_0 = arith.constant 0 : i32
    return %arg0, %c0_i32 : i32, i32
  }
  func.func @transform_2(%arg0: i32) -> (i32, i32) {
    %c0_i32 = arith.constant 0 : i32
    %c0_i32_0 = arith.constant 0 : i32
    %c0_i32_1 = arith.constant 0 : i32
    return %c0_i32, %c0_i32_0 : i32, i32
  }
  func.func @transform_3(%arg0: i32) -> (i32, i32) {
    %c0_i32 = arith.constant 0 : i32
    %c0_i32_0 = arith.constant 0 : i32
    %c0_i32_1 = arith.constant 0 : i32
    return %c0_i32, %c0_i32_0 : i32, i32
  }
  func.func @transform_4(%arg0: i32) -> (i32, i32) {
    %c0_i32 = arith.constant 0 : i32
    %c0_i32_0 = arith.constant 0 : i32
    %c0_i32_1 = arith.constant 0 : i32
    return %c0_i32, %c0_i32_0 : i32, i32
  }
  func.func @transform_5(%arg0: i32) -> (i32, i32) {
    %c0_i32 = arith.constant 0 : i32
    %c0_i32_0 = arith.constant 0 : i32
    %c0_i32_1 = arith.constant 0 : i32
    return %c0_i32, %c0_i32_0 : i32, i32
  }
  func.func @transform_6(%arg0: i32) -> (i32, i32) {
    %c0_i32 = arith.constant 0 : i32
    %c0_i32_0 = arith.constant 0 : i32
    return %arg0, %c0_i32 : i32, i32
  }
}

module attributes {stable_mosaic.version = 11 : i64} {
  func.func @_gru_cell_kernel(%arg0: i32, %arg1: memref<16x8xf32, #tpu.memory_space<vmem>>, %arg2: memref<16x256xf32, #tpu.memory_space<vmem>>, %arg3: memref<8x768xf32, #tpu.memory_space<vmem>>, %arg4: memref<256x512xf32, #tpu.memory_space<vmem>>, %arg5: memref<256x256xf32, #tpu.memory_space<vmem>>, %arg6: memref<1x768xf32, #tpu.memory_space<vmem>>, %arg7: memref<16x256xf32, #tpu.memory_space<vmem>>) attributes {dimension_semantics = [#tpu.dimension_semantics<parallel>], iteration_bounds = array<i64: 1>, scalar_prefetch = 0 : i64, scratch_operands = 0 : i64, tpu.core_type = #tpu.core_type<tc>, window_params = [{transform_indices = @transform_0, window_bounds = array<i64: 16, 8>}, {transform_indices = @transform_1, window_bounds = array<i64: 16, 256>}, {pipeline_mode = #tpu.pipeline_mode<synchronous>, transform_indices = @transform_2, window_bounds = array<i64: 8, 768>}, {pipeline_mode = #tpu.pipeline_mode<synchronous>, transform_indices = @transform_3, window_bounds = array<i64: 256, 512>}, {pipeline_mode = #tpu.pipeline_mode<synchronous>, transform_indices = @transform_4, window_bounds = array<i64: 256, 256>}, {pipeline_mode = #tpu.pipeline_mode<synchronous>, transform_indices = @transform_5, window_bounds = array<i64: 1, 768>}, {transform_indices = @transform_6, window_bounds = array<i64: 16, 256>}]} {
    %c0 = arith.constant 0 : index
    %c0_0 = arith.constant 0 : index
    %0 = vector.load %arg1[%c0, %c0_0] : memref<16x8xf32, #tpu.memory_space<vmem>>, vector<16x8xf32>
    %c0_1 = arith.constant 0 : index
    %c0_2 = arith.constant 0 : index
    %1 = vector.load %arg2[%c0_1, %c0_2] : memref<16x256xf32, #tpu.memory_space<vmem>>, vector<16x256xf32>
    %c0_3 = arith.constant 0 : index
    %c0_4 = arith.constant 0 : index
    %2 = vector.load %arg3[%c0_3, %c0_4] : memref<8x768xf32, #tpu.memory_space<vmem>>, vector<8x768xf32>
    %cst = arith.constant dense<0.000000e+00> : vector<16x768xf32>
    %3 = tpu.matmul %0, %2, %cst {dimension_numbers = #tpu.dot_dimension_numbers<[1], [0], [0], [1], [0, 0, 1, 1], [], []>} : vector<16x8xf32>, vector<8x768xf32>, vector<16x768xf32> -> vector<16x768xf32>
    %c0_5 = arith.constant 0 : index
    %c0_6 = arith.constant 0 : index
    %4 = vector.load %arg6[%c0_5, %c0_6] : memref<1x768xf32, #tpu.memory_space<vmem>>, vector<1x768xf32>
    %5 = vector.broadcast %4 : vector<1x768xf32> to vector<16x768xf32>
    %6 = arith.addf %3, %5 : vector<16x768xf32>
    %c0_7 = arith.constant 0 : index
    %c0_8 = arith.constant 0 : index
    %7 = vector.load %arg4[%c0_7, %c0_8] : memref<256x512xf32, #tpu.memory_space<vmem>>, vector<256x512xf32>
    %cst_9 = arith.constant dense<0.000000e+00> : vector<16x512xf32>
    %8 = tpu.matmul %1, %7, %cst_9 {dimension_numbers = #tpu.dot_dimension_numbers<[1], [0], [0], [1], [0, 0, 1, 1], [], []>} : vector<16x256xf32>, vector<256x512xf32>, vector<16x512xf32> -> vector<16x512xf32>
    %9 = vector.extract_strided_slice %6 {offsets = [0, 0], sizes = [16, 256], strides = [1, 1]} : vector<16x768xf32> to vector<16x256xf32>
    %10 = vector.extract_strided_slice %8 {offsets = [0, 0], sizes = [16, 256], strides = [1, 1]} : vector<16x512xf32> to vector<16x256xf32>
    %11 = arith.addf %9, %10 : vector<16x256xf32>
    %12 = vector.extract_strided_slice %6 {offsets = [0, 256], sizes = [16, 256], strides = [1, 1]} : vector<16x768xf32> to vector<16x256xf32>
    %13 = vector.extract_strided_slice %8 {offsets = [0, 256], sizes = [16, 256], strides = [1, 1]} : vector<16x512xf32> to vector<16x256xf32>
    %14 = arith.addf %12, %13 : vector<16x256xf32>
    %15 = vector.extract_strided_slice %6 {offsets = [0, 512], sizes = [16, 256], strides = [1, 1]} : vector<16x768xf32> to vector<16x256xf32>
    %16 = arith.negf %11 : vector<16x256xf32>
    %17 = math.exp %16 : vector<16x256xf32>
    %cst_10 = arith.constant 1.000000e+00 : f32
    %18 = vector.broadcast %cst_10 : f32 to vector<16x256xf32>
    %19 = arith.addf %18, %17 : vector<16x256xf32>
    %20 = arith.divf %18, %19 : vector<16x256xf32>
    %21 = arith.negf %14 : vector<16x256xf32>
    %22 = math.exp %21 : vector<16x256xf32>
    %cst_11 = arith.constant 1.000000e+00 : f32
    %23 = vector.broadcast %cst_11 : f32 to vector<16x256xf32>
    %24 = arith.addf %23, %22 : vector<16x256xf32>
    %25 = arith.divf %23, %24 : vector<16x256xf32>
    %26 = arith.mulf %1, %25 : vector<16x256xf32>
    %c0_12 = arith.constant 0 : index
    %c0_13 = arith.constant 0 : index
    %27 = vector.load %arg5[%c0_12, %c0_13] : memref<256x256xf32, #tpu.memory_space<vmem>>, vector<256x256xf32>
    %cst_14 = arith.constant dense<0.000000e+00> : vector<16x256xf32>
    %28 = tpu.matmul %26, %27, %cst_14 {dimension_numbers = #tpu.dot_dimension_numbers<[1], [0], [0], [1], [0, 0, 1, 1], [], []>} : vector<16x256xf32>, vector<256x256xf32>, vector<16x256xf32> -> vector<16x256xf32>
    %29 = arith.addf %15, %28 : vector<16x256xf32>
    %30 = math.tanh %29 : vector<16x256xf32>
    %cst_15 = arith.constant 1.000000e+00 : f32
    %31 = vector.broadcast %cst_15 : f32 to vector<16x256xf32>
    %32 = arith.subf %31, %20 : vector<16x256xf32>
    %33 = arith.mulf %1, %32 : vector<16x256xf32>
    %34 = arith.mulf %30, %20 : vector<16x256xf32>
    %35 = arith.addf %33, %34 : vector<16x256xf32>
    %c0_16 = arith.constant 0 : index
    %c0_17 = arith.constant 0 : index
    %36 = vector.load %arg7[%c0_16, %c0_17] : memref<16x256xf32, #tpu.memory_space<vmem>>, vector<16x256xf32>
    tpu.vector_store %arg7[%c0_16, %c0_17], %35 {strides = array<i32>} : memref<16x256xf32, #tpu.memory_space<vmem>>, vector<16x256xf32>,
    return
  }
  func.func @transform_0(%arg0: i32) -> (i32, i32) {
    %c0_i32 = arith.constant 0 : i32
    %c0_i32_0 = arith.constant 0 : i32
    return %arg0, %c0_i32 : i32, i32
  }
  func.func @transform_1(%arg0: i32) -> (i32, i32) {
    %c0_i32 = arith.constant 0 : i32
    %c0_i32_0 = arith.constant 0 : i32
    return %arg0, %c0_i32 : i32, i32
  }
  func.func @transform_2(%arg0: i32) -> (i32, i32) {
    %c0_i32 = arith.constant 0 : i32
    %c0_i32_0 = arith.constant 0 : i32
    %c0_i32_1 = arith.constant 0 : i32
    return %c0_i32, %c0_i32_0 : i32, i32
  }
  func.func @transform_3(%arg0: i32) -> (i32, i32) {
    %c0_i32 = arith.constant 0 : i32
    %c0_i32_0 = arith.constant 0 : i32
    %c0_i32_1 = arith.constant 0 : i32
    return %c0_i32, %c0_i32_0 : i32, i32
  }
  func.func @transform_4(%arg0: i32) -> (i32, i32) {
    %c0_i32 = arith.constant 0 : i32
    %c0_i32_0 = arith.constant 0 : i32
    %c0_i32_1 = arith.constant 0 : i32
    return %c0_i32, %c0_i32_0 : i32, i32
  }
  func.func @transform_5(%arg0: i32) -> (i32, i32) {
    %c0_i32 = arith.constant 0 : i32
    %c0_i32_0 = arith.constant 0 : i32
    %c0_i32_1 = arith.constant 0 : i32
    return %c0_i32, %c0_i32_0 : i32, i32
  }
  func.func @transform_6(%arg0: i32) -> (i32, i32) {
    %c0_i32 = arith.constant 0 : i32
    %c0_i32_0 = arith.constant 0 : i32
    return %arg0, %c0_i32 : i32, i32
  }
}

</mosaic_0001>

<llo_original>
// kernel: tpu_custom_call.1
$region0: #{tpu_custom_call.1}
  #allocation0 [shape = 'u32[]', space=smem, size = 0x4, offset = 0x4, fixed_abs, tag = 'smem constant byte address 0x4 - core index']
  #allocation1 [shape = 'u32[144,128]{1,0:T(1,128)}', space=vmem, size = 0x12000, scoped, tag = 'internal scratch']
  %s0 = inlined_call_operand.vmem [shape: f32[16,8], index: 0, kind: input, shape index: {}]
  %s1 = inlined_call_operand.hbm [shape: f32[16,256], index: 1, kind: input, shape index: {}]
  %s2 = inlined_call_operand.hbm [shape: f32[8,768], index: 2, kind: input, shape index: {}]
  %s3 = inlined_call_operand.hbm [shape: f32[256,512], index: 3, kind: input, shape index: {}]
  %s4 = inlined_call_operand.hbm [shape: f32[256,256], index: 4, kind: input, shape index: {}]
  %s5 = inlined_call_operand.vmem [shape: f32[1,768], index: 5, kind: input, shape index: {}]
  %s6 = inlined_call_operand.hbm [shape: f32[16,256], index: 6, kind: output, shape index: {}]
  %s7 = sld [smem:[#allocation0]]
  $region50: #{tpu_custom_call.1} parent=0
    _
  %s9 = ssub.s32 1, %s7
  %s10 = scalar_select 0, %s9, %s7
  $region1: #{tpu_custom_call.1} parent=0
    #allocation2 [shape = 'u8[16384]{0}', space=vmem, size = 0x4000, scoped, tag = 'input window, operand 1, single buffered']
    #allocation3 [shape = 's32[1]{0}', space=sflag, size = 0x4, scoped, tag = 'scoped memory for tpu_custom_call.1']
    #allocation4 [shape = 's32[1]{0}', space=sflag, size = 0x4, scoped, tag = 'scoped memory for tpu_custom_call.1']
    #allocation5 [shape = 'u8[24576]{0}', space=vmem, size = 0x6000, scoped, tag = 'input window, operand 2, single buffered']
    #allocation6 [shape = 's32[1]{0}', space=sflag, size = 0x4, scoped, tag = 'scoped memory for tpu_custom_call.1']
    #allocation7 [shape = 'u8[524288]{0}', space=vmem, size = 0x80000, scoped, tag = 'input window, operand 3, single buffered']
    #allocation8 [shape = 'u8[262144]{0}', space=vmem, size = 0x40000, scoped, tag = 'input window, operand 4, single buffered']
    #allocation9 [shape = 's32[1]{0}', space=sflag, size = 0x4, scoped, tag = 'scoped memory for tpu_custom_call.1']
    #allocation10 [shape = 'u8[16384]{0}', space=vmem, size = 0x4000, scoped, tag = 'output window, operand 0, single buffered']
    %11 = vsyncpa [#allocation3], 0
    %12 = vsyncpa [#allocation6], 0
    %13 = vsyncpa [#allocation9], 0
    %14 = vsyncpa [#allocation4], 0
    // Predicated region
    $region2: #{tpu_custom_call.1} parent=1 // pred_check
      _
    $region3: #{tpu_custom_call.1} parent=1 // pred_check_branch
      %16 = sbr.rel (0) target = $region5
    $region4: #{tpu_custom_call.1} parent=1 // pred_region
      _
    $region5: #{tpu_custom_call.1} parent=1 // pred_fallthru
      _
    // Predicated region
    $region6: #{tpu_custom_call.1} parent=1 // pred_check
      _
    $region7: #{tpu_custom_call.1} parent=1 // pred_check_branch
      %18 = sbr.rel (0) target = $region9
    $region8: #{tpu_custom_call.1} parent=1 // pred_region
      %s20 = ssub.s32 512, 512
      %21 = vsyncadd [#allocation3], %s20
      %s22 = sshll.u32 [#allocation2], 4
      %s23 = int_to_ptr.vmem [resolvable:$true] %s22
      %28 = dma.hbm_to_vmem [thread:$0]  %s1, 512, %s23, [#allocation3], 256, 256, 16
    $region9: #{tpu_custom_call.1} parent=1 // pred_fallthru
      _
    // Predicated region
    $region10: #{tpu_custom_call.1} parent=1 // pred_check
      _
    $region11: #{tpu_custom_call.1} parent=1 // pred_check_branch
      %30 = sbr.rel (0) target = $region13
    $region12: #{tpu_custom_call.1} parent=1 // pred_region
      %s32 = ssub.s32 768, 768
      %33 = vsyncadd [#allocation6], %s32
      %s35 = sshll.u32 [#allocation5], 4
      %s36 = int_to_ptr.vmem [resolvable:$true] %s35
      %38 = dma.hbm_to_vmem [thread:$0]  %s2, 768, %s36, [#allocation6]
    $region13: #{tpu_custom_call.1} parent=1 // pred_fallthru
      _
    // Predicated region
    $region14: #{tpu_custom_call.1} parent=1 // pred_check
      _
    $region15: #{tpu_custom_call.1} parent=1 // pred_check_branch
      %40 = sbr.rel (0) target = $region17
    $region16: #{tpu_custom_call.1} parent=1 // pred_region
      %s42 = ssub.s32 16384, 16384
      %43 = vsyncadd [#allocation6], %s42
      %s44 = sshll.u32 [#allocation7], 4
      %s45 = int_to_ptr.vmem [resolvable:$true] %s44
      %50 = dma.hbm_to_vmem [thread:$0]  %s3, 16384, %s45, [#allocation6], 512, 512, 32
    $region17: #{tpu_custom_call.1} parent=1 // pred_fallthru
      _
    // Predicated region
    $region18: #{tpu_custom_call.1} parent=1 // pred_check
      _
    $region19: #{tpu_custom_call.1} parent=1 // pred_check_branch
      %52 = sbr.rel (0) target = $region21
    $region20: #{tpu_custom_call.1} parent=1 // pred_region
      %s54 = ssub.s32 8192, 8192
      %55 = vsyncadd [#allocation9], %s54
      %s56 = sshll.u32 [#allocation8], 4
      %s57 = int_to_ptr.vmem [resolvable:$true] %s56
      %62 = dma.hbm_to_vmem [thread:$0]  %s4, 8192, %s57, [#allocation9], 256, 256, 16
    $region21: #{tpu_custom_call.1} parent=1 // pred_fallthru
      _
    // Predicated region
    $region22: #{tpu_custom_call.1} parent=1 // pred_check
      _
    $region23: #{tpu_custom_call.1} parent=1 // pred_check_branch
      %64 = sbr.rel (0) target = $region25
    $region24: #{tpu_custom_call.1} parent=1 // pred_region
      _
    $region25: #{tpu_custom_call.1} parent=1 // pred_fallthru
      _
    // Predicated region
    $region26: #{tpu_custom_call.1} parent=1 // pred_check
      _
    $region27: #{tpu_custom_call.1} parent=1 // pred_check_branch
      %66 = sbr.rel (0) target = $region29
    $region28: #{tpu_custom_call.1} parent=1 // pred_region
      %67 = dma.done [#allocation3], 512
    $region29: #{tpu_custom_call.1} parent=1 // pred_fallthru
      _
    // Predicated region
    $region30: #{tpu_custom_call.1} parent=1 // pred_check
      _
    $region31: #{tpu_custom_call.1} parent=1 // pred_check_branch
      %69 = sbr.rel (0) target = $region33
    $region32: #{tpu_custom_call.1} parent=1 // pred_region
      %70 = dma.done [#allocation6], 768
    $region33: #{tpu_custom_call.1} parent=1 // pred_fallthru
      _
    // Predicated region
    $region34: #{tpu_custom_call.1} parent=1 // pred_check
      _
    $region35: #{tpu_custom_call.1} parent=1 // pred_check_branch
      %72 = sbr.rel (0) target = $region37
    $region36: #{tpu_custom_call.1} parent=1 // pred_region
      %73 = dma.done [#allocation6], 16384
    $region37: #{tpu_custom_call.1} parent=1 // pred_fallthru
      _
    // Predicated region
    $region38: #{tpu_custom_call.1} parent=1 // pred_check
      _
    $region39: #{tpu_custom_call.1} parent=1 // pred_check_branch
      %75 = sbr.rel (0) target = $region41
    $region40: #{tpu_custom_call.1} parent=1 // pred_region
      %76 = dma.done [#allocation9], 8192
    $region41: #{tpu_custom_call.1} parent=1 // pred_fallthru
      _
    %v77 = vld [vmem:[%s0] sm:$0xff]
    %v78 = vld [vmem:[%s0 + $0x8] sm:$0xff]
    %v79 = vld [vmem:[#allocation2] sm:$0xff]
    %v80 = vld [vmem:[#allocation2 + $0x8] sm:$0xff]
    %v81 = vld [vmem:[#allocation2 + $0x10] sm:$0xff]
    %v82 = vld [vmem:[#allocation2 + $0x18] sm:$0xff]
    %v83 = vld [vmem:[#allocation5] sm:$0xff]
    %v84 = vld [vmem:[#allocation5 + $0x8] sm:$0xff]
    %v85 = vld [vmem:[#allocation5 + $0x10] sm:$0xff]
    %v86 = vld [vmem:[#allocation5 + $0x18] sm:$0xff]
    %v87 = vld [vmem:[#allocation5 + $0x20] sm:$0xff]
    %v88 = vld [vmem:[#allocation5 + $0x28] sm:$0xff]
    %v89 = vld [vmem:[%s5] sm:$0x3f]
    %v91 = vlaneseq
    %v92 = vshrl.u32 %v91, 7
    %v93 = vsub.s32 0, %v92
    %v94 = vrot.slane %v89, %v93
    %v95 = vlaneseq
    %v96 = vshrl.u32 %v95, 7
    %v97 = vsub.s32 1, %v96
    %v98 = vrot.slane %v89, %v97
    %v99 = vlaneseq
    %v100 = vshrl.u32 %v99, 7
    %v101 = vsub.s32 2, %v100
    %v102 = vrot.slane %v89, %v101
    %v103 = vlaneseq
    %v104 = vshrl.u32 %v103, 7
    %v105 = vsub.s32 3, %v104
    %v106 = vrot.slane %v89, %v105
    %v107 = vlaneseq
    %v108 = vshrl.u32 %v107, 7
    %v109 = vsub.s32 4, %v108
    %v110 = vrot.slane %v89, %v109
    %v111 = vlaneseq
    %v112 = vshrl.u32 %v111, 7
    %v113 = vsub.s32 5, %v112
    %v114 = vrot.slane %v89, %v113
    %vm121 = vcmask 64512
    %v123 = vsel %vm121, %v77, 0
    %v126 = vsel %vm121, %v78, 0
    %128 = vmatprep.subr.mxu0 %v84
    %129 = vmatpush1.msra.mxu0 %v83
    %130 = vmatprep.subr.mxu0 0.0
    %131 = vmatpush1.msra.mxu0 0.0
    %132 = vmatprep.subr.mxu0 0.0
    %133 = vmatpush1.msra.mxu0 0.0
    %134 = vmatprep.subr.mxu0 0.0
    %135 = vmatpush1.msra.mxu0 0.0
    %136 = vmatprep.subr.mxu0 0.0
    %137 = vmatpush1.msra.mxu0 0.0
    %138 = vmatprep.subr.mxu0 0.0
    %139 = vmatpush1.msra.mxu0 0.0
    %140 = vmatprep.subr.mxu0 0.0
    %141 = vmatpush1.msra.mxu0 0.0
    %142 = vmatprep.subr.mxu0 0.0
    %143 = vmatpush1.msra.mxu0 0.0
    %144 = vmatprep.subr.mxu0 0.0
    %145 = vmatpush1.msra.mxu0 0.0
    %146 = vmatprep.subr.mxu0 0.0
    %147 = vmatpush1.msra.mxu0 0.0
    %148 = vmatprep.subr.mxu0 0.0
    %149 = vmatpush1.msra.mxu0 0.0
    %150 = vmatprep.subr.mxu0 0.0
    %151 = vmatpush1.msra.mxu0 0.0
    %152 = vmatprep.subr.mxu0 0.0
    %153 = vmatpush1.msra.mxu0 0.0
    %154 = vmatprep.subr.mxu0 0.0
    %155 = vmatpush1.msra.mxu0 0.0
    %156 = vmatprep.subr.mxu0 0.0
    %157 = vmatpush1.msra.mxu0 0.0
    %158 = vmatprep.subr.mxu0 0.0
    %159 = vmatpush1.msra.mxu0 0.0
    %160 = vmatprep.subr.mxu0 0.0
    %161 = vmatpush1.msra.mxu0 0.0
    %162 = vmatprep.subr.mxu0 0.0
    %163 = vmatpush1.msra.mxu0 0.0
    %164 = vmatprep.subr.mxu0 0.0
    %165 = vmatpush1.msra.mxu0 0.0
    %166 = vmatprep.subr.mxu0 0.0
    %167 = vmatpush1.msra.mxu0 0.0
    %168 = vmatprep.subr.mxu0 0.0
    %169 = vmatpush1.msra.mxu0 0.0
    %170 = vmatprep.subr.mxu0 0.0
    %171 = vmatpush1.msra.mxu0 0.0
    %172 = vmatprep.subr.mxu0 0.0
    %173 = vmatpush1.msra.mxu0 0.0
    %174 = vmatprep.subr.mxu0 0.0
    %175 = vmatpush1.msra.mxu0 0.0
    %176 = vmatprep.subr.mxu0 0.0
    %177 = vmatpush1.msra.mxu0 0.0
    %178 = vmatprep.subr.mxu0 0.0
    %179 = vmatpush1.msra.mxu0 0.0
    %180 = vmatprep.subr.mxu0 0.0
    %181 = vmatpush1.msra.mxu0 0.0
    %182 = vmatprep.subr.mxu0 0.0
    %183 = vmatpush1.msra.mxu0 0.0
    %184 = vmatprep.subr.mxu0 0.0
    %185 = vmatpush1.msra.mxu0 0.0
    %186 = vmatprep.subr.mxu0 0.0
    %187 = vmatpush1.msra.mxu0 0.0
    %188 = vmatprep.subr.mxu0 0.0
    %189 = vmatpush1.msra.mxu0 0.0
    %190 = vmatprep.subr.mxu0 0.0
    %191 = vmatpush1.msra.mxu0 0.0
    %192 = vmatprep.mubr.f32.mxu0 0.0
    %193 = vmatmul.mubr.f32.gmra.mrb[0].mxu0 %v123
    %v194 = vpop.f32.mrb[0].mxu0
    %v195 = vadd.f32 %v94, %v194
    %v196 = vpop.f32.mrb[0].mxu0
    %v197 = vadd.f32 %v98, %v196
    %198 = vmatprep.mubr.f32.mxu0 0.0
    %199 = vmatmul.mubr.f32.gmra.mrb[0].mxu0 %v126
    %v200 = vpop.f32.mrb[0].mxu0
    %v201 = vadd.f32 %v94, %v200
    %v202 = vpop.f32.mrb[0].mxu0
    %v203 = vadd.f32 %v98, %v202
    %204 = vdwg.mxu0
    %205 = vmatprep.subr.mxu0 %v86
    %206 = vmatpush1.msra.mxu0 %v85
    %207 = vmatprep.subr.mxu0 0.0
    %208 = vmatpush1.msra.mxu0 0.0
    %209 = vmatprep.subr.mxu0 0.0
    %210 = vmatpush1.msra.mxu0 0.0
    %211 = vmatprep.subr.mxu0 0.0
    %212 = vmatpush1.msra.mxu0 0.0
    %213 = vmatprep.subr.mxu0 0.0
    %214 = vmatpush1.msra.mxu0 0.0
    %215 = vmatprep.subr.mxu0 0.0
    %216 = vmatpush1.msra.mxu0 0.0
    %217 = vmatprep.subr.mxu0 0.0
    %218 = vmatpush1.msra.mxu0 0.0
    %219 = vmatprep.subr.mxu0 0.0
    %220 = vmatpush1.msra.mxu0 0.0
    %221 = vmatprep.subr.mxu0 0.0
    %222 = vmatpush1.msra.mxu0 0.0
    %223 = vmatprep.subr.mxu0 0.0
    %224 = vmatpush1.msra.mxu0 0.0
    %225 = vmatprep.subr.mxu0 0.0
    %226 = vmatpush1.msra.mxu0 0.0
    %227 = vmatprep.subr.mxu0 0.0
    %228 = vmatpush1.msra.mxu0 0.0
    %229 = vmatprep.subr.mxu0 0.0
    %230 = vmatpush1.msra.mxu0 0.0
    %231 = vmatprep.subr.mxu0 0.0
    %232 = vmatpush1.msra.mxu0 0.0
    %233 = vmatprep.subr.mxu0 0.0
    %234 = vmatpush1.msra.mxu0 0.0
    %235 = vmatprep.subr.mxu0 0.0
    %236 = vmatpush1.msra.mxu0 0.0
    %237 = vmatprep.subr.mxu0 0.0
    %238 = vmatpush1.msra.mxu0 0.0
    %239 = vmatprep.subr.mxu0 0.0
    %240 = vmatpush1.msra.mxu0 0.0
    %241 = vmatprep.subr.mxu0 0.0
    %242 = vmatpush1.msra.mxu0 0.0
    %243 = vmatprep.subr.mxu0 0.0
    %244 = vmatpush1.msra.mxu0 0.0
    %245 = vmatprep.subr.mxu0 0.0
    %246 = vmatpush1.msra.mxu0 0.0
    %247 = vmatprep.subr.mxu0 0.0
    %248 = vmatpush1.msra.mxu0 0.0
    %249 = vmatprep.subr.mxu0 0.0
    %250 = vmatpush1.msra.mxu0 0.0
    %251 = vmatprep.subr.mxu0 0.0
    %252 = vmatpush1.msra.mxu0 0.0
    %253 = vmatprep.subr.mxu0 0.0
    %254 = vmatpush1.msra.mxu0 0.0
    %255 = vmatprep.subr.mxu0 0.0
    %256 = vmatpush1.msra.mxu0 0.0
    %257 = vmatprep.subr.mxu0 0.0
    %258 = vmatpush1.msra.mxu0 0.0
    %259 = vmatprep.subr.mxu0 0.0
    %260 = vmatpush1.msra.mxu0 0.0
    %261 = vmatprep.subr.mxu0 0.0
    %262 = vmatpush1.msra.mxu0 0.0
    %263 = vmatprep.subr.mxu0 0.0
    %264 = vmatpush1.msra.mxu0 0.0
    %265 = vmatprep.subr.mxu0 0.0
    %266 = vmatpush1.msra.mxu0 0.0
    %267 = vmatprep.subr.mxu0 0.0
    %268 = vmatpush1.msra.mxu0 0.0
    %269 = vmatprep.mubr.f32.mxu0 0.0
    %270 = vmatmul.mubr.f32.gmra.mrb[0].mxu0 %v123
    %v271 = vpop.f32.mrb[0].mxu0
    %v272 = vadd.f32 %v102, %v271
    %v273 = vpop.f32.mrb[0].mxu0
    %v274 = vadd.f32 %v106, %v273
    %275 = vmatprep.mubr.f32.mxu0 0.0
    %276 = vmatmul.mubr.f32.gmra.mrb[0].mxu0 %v126
    %v277 = vpop.f32.mrb[0].mxu0
    %v278 = vadd.f32 %v102, %v277
    %v279 = vpop.f32.mrb[0].mxu0
    %v280 = vadd.f32 %v106, %v279
    %281 = vdwg.mxu0
    %282 = vmatprep.subr.mxu0 %v88
    %283 = vmatpush1.msra.mxu0 %v87
    %284 = vmatprep.subr.mxu0 0.0
    %285 = vmatpush1.msra.mxu0 0.0
    %286 = vmatprep.subr.mxu0 0.0
    %287 = vmatpush1.msra.mxu0 0.0
    %288 = vmatprep.subr.mxu0 0.0
    %289 = vmatpush1.msra.mxu0 0.0
    %290 = vmatprep.subr.mxu0 0.0
    %291 = vmatpush1.msra.mxu0 0.0
    %292 = vmatprep.subr.mxu0 0.0
    %293 = vmatpush1.msra.mxu0 0.0
    %294 = vmatprep.subr.mxu0 0.0
    %295 = vmatpush1.msra.mxu0 0.0
    %296 = vmatprep.subr.mxu0 0.0
    %297 = vmatpush1.msra.mxu0 0.0
    %298 = vmatprep.subr.mxu0 0.0
    %299 = vmatpush1.msra.mxu0 0.0
    %300 = vmatprep.subr.mxu0 0.0
    %301 = vmatpush1.msra.mxu0 0.0
    %302 = vmatprep.subr.mxu0 0.0
    %303 = vmatpush1.msra.mxu0 0.0
    %304 = vmatprep.subr.mxu0 0.0
    %305 = vmatpush1.msra.mxu0 0.0
    %306 = vmatprep.subr.mxu0 0.0
    %307 = vmatpush1.msra.mxu0 0.0
    %308 = vmatprep.subr.mxu0 0.0
    %309 = vmatpush1.msra.mxu0 0.0
    %310 = vmatprep.subr.mxu0 0.0
    %311 = vmatpush1.msra.mxu0 0.0
    %312 = vmatprep.subr.mxu0 0.0
    %313 = vmatpush1.msra.mxu0 0.0
    %314 = vmatprep.subr.mxu0 0.0
    %315 = vmatpush1.msra.mxu0 0.0
    %316 = vmatprep.subr.mxu0 0.0
    %317 = vmatpush1.msra.mxu0 0.0
    %318 = vmatprep.subr.mxu0 0.0
    %319 = vmatpush1.msra.mxu0 0.0
    %320 = vmatprep.subr.mxu0 0.0
    %321 = vmatpush1.msra.mxu0 0.0
    %322 = vmatprep.subr.mxu0 0.0
    %323 = vmatpush1.msra.mxu0 0.0
    %324 = vmatprep.subr.mxu0 0.0
    %325 = vmatpush1.msra.mxu0 0.0
    %326 = vmatprep.subr.mxu0 0.0
    %327 = vmatpush1.msra.mxu0 0.0
    %328 = vmatprep.subr.mxu0 0.0
    %329 = vmatpush1.msra.mxu0 0.0
    %330 = vmatprep.subr.mxu0 0.0
    %331 = vmatpush1.msra.mxu0 0.0
    %332 = vmatprep.subr.mxu0 0.0
    %333 = vmatpush1.msra.mxu0 0.0
    %334 = vmatprep.subr.mxu0 0.0
    %335 = vmatpush1.msra.mxu0 0.0
    %336 = vmatprep.subr.mxu0 0.0
    %337 = vmatpush1.msra.mxu0 0.0
    %338 = vmatprep.subr.mxu0 0.0
    %339 = vmatpush1.msra.mxu0 0.0
    %340 = vmatprep.subr.mxu0 0.0
    %341 = vmatpush1.msra.mxu0 0.0
    %342 = vmatprep.subr.mxu0 0.0
    %343 = vmatpush1.msra.mxu0 0.0
    %344 = vmatprep.subr.mxu0 0.0
    %345 = vmatpush1.msra.mxu0 0.0
    %346 = vmatprep.mubr.f32.mxu0 0.0
    %347 = vmatmul.mubr.f32.gmra.mrb[0].mxu0 %v123
    %v348 = vpop.f32.mrb[0].mxu0
    %v349 = vadd.f32 %v110, %v348
    %v350 = vpop.f32.mrb[0].mxu0
    %v351 = vadd.f32 %v114, %v350
    %352 = vmatprep.mubr.f32.mxu0 0.0
    %353 = vmatmul.mubr.f32.gmra.mrb[0].mxu0 %v126
    %v354 = vpop.f32.mrb[0].mxu0
    %v355 = vadd.f32 %v110, %v354
    %v356 = vpop.f32.mrb[0].mxu0
    %v357 = vadd.f32 %v114, %v356
    %358 = vdwg.mxu0
    %v359 = vld [vmem:[#allocation7] sm:$0xff]
    %v360 = vld [vmem:[#allocation7 + $0x8] sm:$0xff]
    %v361 = vld [vmem:[#allocation7 + $0x10] sm:$0xff]
    %v362 = vld [vmem:[#allocation7 + $0x18] sm:$0xff]
    %v363 = vld [vmem:[#allocation7 + $0x20] sm:$0xff]
    %v364 = vld [vmem:[#allocation7 + $0x28] sm:$0xff]
    %v365 = vld [vmem:[#allocation7 + $0x30] sm:$0xff]
    %v366 = vld [vmem:[#allocation7 + $0x38] sm:$0xff]
    %v367 = vld [vmem:[#allocation7 + $0x40] sm:$0xff]
    %v368 = vld [vmem:[#allocation7 + $0x48] sm:$0xff]
    %v369 = vld [vmem:[#allocation7 + $0x50] sm:$0xff]
    %v370 = vld [vmem:[#allocation7 + $0x58] sm:$0xff]
    %v371 = vld [vmem:[#allocation7 + $0x60] sm:$0xff]
    %v372 = vld [vmem:[#allocation7 + $0x68] sm:$0xff]
    %v373 = vld [vmem:[#allocation7 + $0x70] sm:$0xff]
    %v374 = vld [vmem:[#allocation7 + $0x78] sm:$0xff]
    %v375 = vld [vmem:[#allocation7 + $0x80] sm:$0xff]
    %v376 = vld [vmem:[#allocation7 + $0x88] sm:$0xff]
    %v377 = vld [vmem:[#allocation7 + $0x90] sm:$0xff]
    %v378 = vld [vmem:[#allocation7 + $0x98] sm:$0xff]
    %v379 = vld [vmem:[#allocation7 + $0xa0] sm:$0xff]
    %v380 = vld [vmem:[#allocation7 + $0xa8] sm:$0xff]
    %v381 = vld [vmem:[#allocation7 + $0xb0] sm:$0xff]
    %v382 = vld [vmem:[#allocation7 + $0xb8] sm:$0xff]
    %v383 = vld [vmem:[#allocation7 + $0xc0] sm:$0xff]
    %v384 = vld [vmem:[#allocation7 + $0xc8] sm:$0xff]
    %v385 = vld [vmem:[#allocation7 + $0xd0] sm:$0xff]
    %v386 = vld [vmem:[#allocation7 + $0xd8] sm:$0xff]
    %v387 = vld [vmem:[#allocation7 + $0xe0] sm:$0xff]
    %v388 = vld [vmem:[#allocation7 + $0xe8] sm:$0xff]
    %v389 = vld [vmem:[#allocation7 + $0xf0] sm:$0xff]
    %v390 = vld [vmem:[#allocation7 + $0xf8] sm:$0xff]
    %v391 = vld [vmem:[#allocation7 + $0x100] sm:$0xff]
    %v392 = vld [vmem:[#allocation7 + $0x108] sm:$0xff]
    %v393 = vld [vmem:[#allocation7 + $0x110] sm:$0xff]
    %v394 = vld [vmem:[#allocation7 + $0x118] sm:$0xff]
    %v395 = vld [vmem:[#allocation7 + $0x120] sm:$0xff]
    %v396 = vld [vmem:[#allocation7 + $0x128] sm:$0xff]
    %v397 = vld [vmem:[#allocation7 + $0x130] sm:$0xff]
    %v398 = vld [vmem:[#allocation7 + $0x138] sm:$0xff]
    %v399 = vld [vmem:[#allocation7 + $0x140] sm:$0xff]
    %v400 = vld [vmem:[#allocation7 + $0x148] sm:$0xff]
    %v401 = vld [vmem:[#allocation7 + $0x150] sm:$0xff]
    %v402 = vld [vmem:[#allocation7 + $0x158] sm:$0xff]
    %v403 = vld [vmem:[#allocation7 + $0x160] sm:$0xff]
    %v404 = vld [vmem:[#allocation7 + $0x168] sm:$0xff]
    %v405 = vld [vmem:[#allocation7 + $0x170] sm:$0xff]
    %v406 = vld [vmem:[#allocation7 + $0x178] sm:$0xff]
    %v407 = vld [vmem:[#allocation7 + $0x180] sm:$0xff]
    %v408 = vld [vmem:[#allocation7 + $0x188] sm:$0xff]
    %v409 = vld [vmem:[#allocation7 + $0x190] sm:$0xff]
    %v410 = vld [vmem:[#allocation7 + $0x198] sm:$0xff]
    %v411 = vld [vmem:[#allocation7 + $0x1a0] sm:$0xff]
    %v412 = vld [vmem:[#allocation7 + $0x1a8] sm:$0xff]
    %v413 = vld [vmem:[#allocation7 + $0x1b0] sm:$0xff]
    %v414 = vld [vmem:[#allocation7 + $0x1b8] sm:$0xff]
    %v415 = vld [vmem:[#allocation7 + $0x1c0] sm:$0xff]
    %v416 = vld [vmem:[#allocation7 + $0x1c8] sm:$0xff]
    %v417 = vld [vmem:[#allocation7 + $0x1d0] sm:$0xff]
    %v418 = vld [vmem:[#allocation7 + $0x1d8] sm:$0xff]
    %v419 = vld [vmem:[#allocation7 + $0x1e0] sm:$0xff]
    %v420 = vld [vmem:[#allocation7 + $0x1e8] sm:$0xff]
    %v421 = vld [vmem:[#allocation7 + $0x1f0] sm:$0xff]
    %v422 = vld [vmem:[#allocation7 + $0x1f8] sm:$0xff]
    %v423 = vld [vmem:[#allocation7 + $0x200] sm:$0xff]
    %v424 = vld [vmem:[#allocation7 + $0x208] sm:$0xff]
    %v425 = vld [vmem:[#allocation7 + $0x210] sm:$0xff]
    %v426 = vld [vmem:[#allocation7 + $0x218] sm:$0xff]
    %v427 = vld [vmem:[#allocation7 + $0x220] sm:$0xff]
    %v428 = vld [vmem:[#allocation7 + $0x228] sm:$0xff]
    %v429 = vld [vmem:[#allocation7 + $0x230] sm:$0xff]
    %v430 = vld [vmem:[#allocation7 + $0x238] sm:$0xff]
    %v431 = vld [vmem:[#allocation7 + $0x240] sm:$0xff]
    %v432 = vld [vmem:[#allocation7 + $0x248] sm:$0xff]
    %v433 = vld [vmem:[#allocation7 + $0x250] sm:$0xff]
    %v434 = vld [vmem:[#allocation7 + $0x258] sm:$0xff]
    %v435 = vld [vmem:[#allocation7 + $0x260] sm:$0xff]
    %v436 = vld [vmem:[#allocation7 + $0x268] sm:$0xff]
    %v437 = vld [vmem:[#allocation7 + $0x270] sm:$0xff]
    %v438 = vld [vmem:[#allocation7 + $0x278] sm:$0xff]
    %v439 = vld [vmem:[#allocation7 + $0x280] sm:$0xff]
    %v440 = vld [vmem:[#allocation7 + $0x288] sm:$0xff]
    %v441 = vld [vmem:[#allocation7 + $0x290] sm:$0xff]
    %v442 = vld [vmem:[#allocation7 + $0x298] sm:$0xff]
    %v443 = vld [vmem:[#allocation7 + $0x2a0] sm:$0xff]
    %v444 = vld [vmem:[#allocation7 + $0x2a8] sm:$0xff]
    %v445 = vld [vmem:[#allocation7 + $0x2b0] sm:$0xff]
    %v446 = vld [vmem:[#allocation7 + $0x2b8] sm:$0xff]
    %v447 = vld [vmem:[#allocation7 + $0x2c0] sm:$0xff]
    %v448 = vld [vmem:[#allocation7 + $0x2c8] sm:$0xff]
    %v449 = vld [vmem:[#allocation7 + $0x2d0] sm:$0xff]
    %v450 = vld [vmem:[#allocation7 + $0x2d8] sm:$0xff]
    %v451 = vld [vmem:[#allocation7 + $0x2e0] sm:$0xff]
    %v452 = vld [vmem:[#allocation7 + $0x2e8] sm:$0xff]
    %v453 = vld [vmem:[#allocation7 + $0x2f0] sm:$0xff]
    %v454 = vld [vmem:[#allocation7 + $0x2f8] sm:$0xff]
    %v455 = vld [vmem:[#allocation7 + $0x300] sm:$0xff]
    %v456 = vld [vmem:[#allocation7 + $0x308] sm:$0xff]
    %v457 = vld [vmem:[#allocation7 + $0x310] sm:$0xff]
    %v458 = vld [vmem:[#allocation7 + $0x318] sm:$0xff]
    %v459 = vld [vmem:[#allocation7 + $0x320] sm:$0xff]
    %v460 = vld [vmem:[#allocation7 + $0x328] sm:$0xff]
    %v461 = vld [vmem:[#allocation7 + $0x330] sm:$0xff]
    %v462 = vld [vmem:[#allocation7 + $0x338] sm:$0xff]
    %v463 = vld [vmem:[#allocation7 + $0x340] sm:$0xff]
    %v464 = vld [vmem:[#allocation7 + $0x348] sm:$0xff]
    %v465 = vld [vmem:[#allocation7 + $0x350] sm:$0xff]
    %v466 = vld [vmem:[#allocation7 + $0x358] sm:$0xff]
    %v467 = vld [vmem:[#allocation7 + $0x360] sm:$0xff]
    %v468 = vld [vmem:[#allocation7 + $0x368] sm:$0xff]
    %v469 = vld [vmem:[#allocation7 + $0x370] sm:$0xff]
    %v470 = vld [vmem:[#allocation7 + $0x378] sm:$0xff]
    %v471 = vld [vmem:[#allocation7 + $0x380] sm:$0xff]
    %v472 = vld [vmem:[#allocation7 + $0x388] sm:$0xff]
    %v473 = vld [vmem:[#allocation7 + $0x390] sm:$0xff]
    %v474 = vld [vmem:[#allocation7 + $0x398] sm:$0xff]
    %v475 = vld [vmem:[#allocation7 + $0x3a0] sm:$0xff]
    %v476 = vld [vmem:[#allocation7 + $0x3a8] sm:$0xff]
    %v477 = vld [vmem:[#allocation7 + $0x3b0] sm:$0xff]
    %v478 = vld [vmem:[#allocation7 + $0x3b8] sm:$0xff]
    %v479 = vld [vmem:[#allocation7 + $0x3c0] sm:$0xff]
    %v480 = vld [vmem:[#allocation7 + $0x3c8] sm:$0xff]
    %v481 = vld [vmem:[#allocation7 + $0x3d0] sm:$0xff]
    %v482 = vld [vmem:[#allocation7 + $0x3d8] sm:$0xff]
    %v483 = vld [vmem:[#allocation7 + $0x3e0] sm:$0xff]
    %v484 = vld [vmem:[#allocation7 + $0x3e8] sm:$0xff]
    %v485 = vld [vmem:[#allocation7 + $0x3f0] sm:$0xff]
    %v486 = vld [vmem:[#allocation7 + $0x3f8] sm:$0xff]
    %487 = vmatprep.subr.mxu0 %v360
    %488 = vmatpush1.msra.mxu0 %v359
    %489 = vmatprep.subr.mxu0 %v364
    %490 = vmatpush1.msra.mxu0 %v363
    %491 = vmatprep.subr.mxu0 %v368
    %492 = vmatpush1.msra.mxu0 %v367
    %493 = vmatprep.subr.mxu0 %v372
    %494 = vmatpush1.msra.mxu0 %v371
    %495 = vmatprep.subr.mxu0 %v376
    %496 = vmatpush1.msra.mxu0 %v375
    %497 = vmatprep.subr.mxu0 %v380
    %498 = vmatpush1.msra.mxu0 %v379
    %499 = vmatprep.subr.mxu0 %v384
    %500 = vmatpush1.msra.mxu0 %v383
    %501 = vmatprep.subr.mxu0 %v388
    %502 = vmatpush1.msra.mxu0 %v387
    %503 = vmatprep.subr.mxu0 %v392
    %504 = vmatpush1.msra.mxu0 %v391
    %505 = vmatprep.subr.mxu0 %v396
    %506 = vmatpush1.msra.mxu0 %v395
    %507 = vmatprep.subr.mxu0 %v400
    %508 = vmatpush1.msra.mxu0 %v399
    %509 = vmatprep.subr.mxu0 %v404
    %510 = vmatpush1.msra.mxu0 %v403
    %511 = vmatprep.subr.mxu0 %v408
    %512 = vmatpush1.msra.mxu0 %v407
    %513 = vmatprep.subr.mxu0 %v412
    %514 = vmatpush1.msra.mxu0 %v411
    %515 = vmatprep.subr.mxu0 %v416
    %516 = vmatpush1.msra.mxu0 %v415
    %517 = vmatprep.subr.mxu0 %v420
    %518 = vmatpush1.msra.mxu0 %v419
    %519 = vmatprep.subr.mxu0 %v424
    %520 = vmatpush1.msra.mxu0 %v423
    %521 = vmatprep.subr.mxu0 %v428
    %522 = vmatpush1.msra.mxu0 %v427
    %523 = vmatprep.subr.mxu0 %v432
    %524 = vmatpush1.msra.mxu0 %v431
    %525 = vmatprep.subr.mxu0 %v436
    %526 = vmatpush1.msra.mxu0 %v435
    %527 = vmatprep.subr.mxu0 %v440
    %528 = vmatpush1.msra.mxu0 %v439
    %529 = vmatprep.subr.mxu0 %v444
    %530 = vmatpush1.msra.mxu0 %v443
    %531 = vmatprep.subr.mxu0 %v448
    %532 = vmatpush1.msra.mxu0 %v447
    %533 = vmatprep.subr.mxu0 %v452
    %534 = vmatpush1.msra.mxu0 %v451
    %535 = vmatprep.subr.mxu0 %v456
    %536 = vmatpush1.msra.mxu0 %v455
    %537 = vmatprep.subr.mxu0 %v460
    %538 = vmatpush1.msra.mxu0 %v459
    %539 = vmatprep.subr.mxu0 %v464
    %540 = vmatpush1.msra.mxu0 %v463
    %541 = vmatprep.subr.mxu0 %v468
    %542 = vmatpush1.msra.mxu0 %v467
    %543 = vmatprep.subr.mxu0 %v472
    %544 = vmatpush1.msra.mxu0 %v471
    %545 = vmatprep.subr.mxu0 %v476
    %546 = vmatpush1.msra.mxu0 %v475
    %547 = vmatprep.subr.mxu0 %v480
    %548 = vmatpush1.msra.mxu0 %v479
    %549 = vmatprep.subr.mxu0 %v484
    %550 = vmatpush1.msra.mxu0 %v483
    %551 = vmatprep.mubr.f32.mxu0 %v80
    %552 = vmatmul.mubr.f32.gmra.mrb[0].mxu0 %v79
    %v553 = vpop.f32.mrb[0].mxu0
    %v554 = vadd.f32 0.0, %v553
    %v555 = vpop.f32.mrb[0].mxu0
    %v556 = vadd.f32 0.0, %v555
    %557 = vmatprep.mubr.f32.mxu0 %v82
    %558 = vmatmul.mubr.f32.gmra.mrb[0].mxu0 %v81
    %v559 = vpop.f32.mrb[0].mxu0
    %v560 = vadd.f32 0.0, %v559
    %v561 = vpop.f32.mrb[0].mxu0
    %v562 = vadd.f32 0.0, %v561
    %563 = vdwg.mxu0
    %564 = vmatprep.subr.mxu0 %v362
    %565 = vmatpush1.msra.mxu0 %v361
    %566 = vmatprep.subr.mxu0 %v366
    %567 = vmatpush1.msra.mxu0 %v365
    %568 = vmatprep.subr.mxu0 %v370
    %569 = vmatpush1.msra.mxu0 %v369
    %570 = vmatprep.subr.mxu0 %v374
    %571 = vmatpush1.msra.mxu0 %v373
    %572 = vmatprep.subr.mxu0 %v378
    %573 = vmatpush1.msra.mxu0 %v377
    %574 = vmatprep.subr.mxu0 %v382
    %575 = vmatpush1.msra.mxu0 %v381
    %576 = vmatprep.subr.mxu0 %v386
    %577 = vmatpush1.msra.mxu0 %v385
    %578 = vmatprep.subr.mxu0 %v390
    %579 = vmatpush1.msra.mxu0 %v389
    %580 = vmatprep.subr.mxu0 %v394
    %581 = vmatpush1.msra.mxu0 %v393
    %582 = vmatprep.subr.mxu0 %v398
    %583 = vmatpush1.msra.mxu0 %v397
    %584 = vmatprep.subr.mxu0 %v402
    %585 = vmatpush1.msra.mxu0 %v401
    %586 = vmatprep.subr.mxu0 %v406
    %587 = vmatpush1.msra.mxu0 %v405
    %588 = vmatprep.subr.mxu0 %v410
    %589 = vmatpush1.msra.mxu0 %v409
    %590 = vmatprep.subr.mxu0 %v414
    %591 = vmatpush1.msra.mxu0 %v413
    %592 = vmatprep.subr.mxu0 %v418
    %593 = vmatpush1.msra.mxu0 %v417
    %594 = vmatprep.subr.mxu0 %v422
    %595 = vmatpush1.msra.mxu0 %v421
    %596 = vmatprep.subr.mxu0 %v426
    %597 = vmatpush1.msra.mxu0 %v425
    %598 = vmatprep.subr.mxu0 %v430
    %599 = vmatpush1.msra.mxu0 %v429
    %600 = vmatprep.subr.mxu0 %v434
    %601 = vmatpush1.msra.mxu0 %v433
    %602 = vmatprep.subr.mxu0 %v438
    %603 = vmatpush1.msra.mxu0 %v437
    %604 = vmatprep.subr.mxu0 %v442
    %605 = vmatpush1.msra.mxu0 %v441
    %606 = vmatprep.subr.mxu0 %v446
    %607 = vmatpush1.msra.mxu0 %v445
    %608 = vmatprep.subr.mxu0 %v450
    %609 = vmatpush1.msra.mxu0 %v449
    %610 = vmatprep.subr.mxu0 %v454
    %611 = vmatpush1.msra.mxu0 %v453
    %612 = vmatprep.subr.mxu0 %v458
    %613 = vmatpush1.msra.mxu0 %v457
    %614 = vmatprep.subr.mxu0 %v462
    %615 = vmatpush1.msra.mxu0 %v461
    %616 = vmatprep.subr.mxu0 %v466
    %617 = vmatpush1.msra.mxu0 %v465
    %618 = vmatprep.subr.mxu0 %v470
    %619 = vmatpush1.msra.mxu0 %v469
    %620 = vmatprep.subr.mxu0 %v474
    %621 = vmatpush1.msra.mxu0 %v473
    %622 = vmatprep.subr.mxu0 %v478
    %623 = vmatpush1.msra.mxu0 %v477
    %624 = vmatprep.subr.mxu0 %v482
    %625 = vmatpush1.msra.mxu0 %v481
    %626 = vmatprep.subr.mxu0 %v486
    %627 = vmatpush1.msra.mxu0 %v485
    %628 = vmatprep.mubr.f32.mxu0 %v80
    %629 = vmatmul.mubr.f32.gmra.mrb[0].mxu0 %v79
    %v630 = vpop.f32.mrb[0].mxu0
    %v631 = vadd.f32 0.0, %v630
    %v632 = vpop.f32.mrb[0].mxu0
    %v633 = vadd.f32 0.0, %v632
    %634 = vmatprep.mubr.f32.mxu0 %v82
    %635 = vmatmul.mubr.f32.gmra.mrb[0].mxu0 %v81
    %v636 = vpop.f32.mrb[0].mxu0
    %v637 = vadd.f32 0.0, %v636
    %v638 = vpop.f32.mrb[0].mxu0
    %v639 = vadd.f32 0.0, %v638
    %640 = vdwg.mxu0
    %v641 = vadd.f32 %v195, %v554
    %v642 = vadd.f32 %v197, %v556
    %v643 = vadd.f32 %v201, %v560
    %v644 = vadd.f32 %v203, %v562
    %v645 = vadd.f32 %v272, %v631
    %v646 = vadd.f32 %v274, %v633
    %v647 = vadd.f32 %v278, %v637
    %v648 = vadd.f32 %v280, %v639
    %v649 = vxor.u32 %v641, 2147483648
    %v650 = vxor.u32 %v642, 2147483648
    %v651 = vxor.u32 %v643, 2147483648
    %v652 = vxor.u32 %v644, 2147483648
    %v653 = vmul.f32 %v649, 1.442695
    %v654 = vpow.pop %v653
    %v655 = vmul.f32 %v650, 1.442695
    %v656 = vpow.pop %v655
    %v657 = vmul.f32 %v651, 1.442695
    %v658 = vpow.pop %v657
    %v659 = vmul.f32 %v652, 1.442695
    %v660 = vpow.pop %v659
    %v661 = vadd.f32 %v654, 1.0
    %v662 = vadd.f32 %v656, 1.0
    %v663 = vadd.f32 %v658, 1.0
    %v664 = vadd.f32 %v660, 1.0
    %v665 = vrcp.pop %v661
    %v666 = vmul.f32 1.0, %v665
    %v667 = vrcp.pop %v662
    %v668 = vmul.f32 1.0, %v667
    %v669 = vrcp.pop %v663
    %v670 = vmul.f32 1.0, %v669
    %v671 = vrcp.pop %v664
    %v672 = vmul.f32 1.0, %v671
    %v673 = vxor.u32 %v645, 2147483648
    %v674 = vxor.u32 %v646, 2147483648
    %v675 = vxor.u32 %v647, 2147483648
    %v676 = vxor.u32 %v648, 2147483648
    %v677 = vmul.f32 %v673, 1.442695
    %v678 = vpow.pop %v677
    %v679 = vmul.f32 %v674, 1.442695
    %v680 = vpow.pop %v679
    %v681 = vmul.f32 %v675, 1.442695
    %v682 = vpow.pop %v681
    %v683 = vmul.f32 %v676, 1.442695
    %v684 = vpow.pop %v683
    %v685 = vadd.f32 %v678, 1.0
    %v686 = vadd.f32 %v680, 1.0
    %v687 = vadd.f32 %v682, 1.0
    %v688 = vadd.f32 %v684, 1.0
    %v689 = vrcp.pop %v685
    %v690 = vmul.f32 1.0, %v689
    %v691 = vrcp.pop %v686
    %v692 = vmul.f32 1.0, %v691
    %v693 = vrcp.pop %v687
    %v694 = vmul.f32 1.0, %v693
    %v695 = vrcp.pop %v688
    %v696 = vmul.f32 1.0, %v695
    %v697 = vmul.f32 %v79, %v690
    %v698 = vmul.f32 %v80, %v692
    %v699 = vmul.f32 %v81, %v694
    %v700 = vmul.f32 %v82, %v696
    %v701 = vld [vmem:[#allocation8] sm:$0xff]
    %v702 = vld [vmem:[#allocation8 + $0x8] sm:$0xff]
    %v703 = vld [vmem:[#allocation8 + $0x10] sm:$0xff]
    %v704 = vld [vmem:[#allocation8 + $0x18] sm:$0xff]
    %v705 = vld [vmem:[#allocation8 + $0x20] sm:$0xff]
    %v706 = vld [vmem:[#allocation8 + $0x28] sm:$0xff]
    %v707 = vld [vmem:[#allocation8 + $0x30] sm:$0xff]
    %v708 = vld [vmem:[#allocation8 + $0x38] sm:$0xff]
    %v709 = vld [vmem:[#allocation8 + $0x40] sm:$0xff]
    %v710 = vld [vmem:[#allocation8 + $0x48] sm:$0xff]
    %v711 = vld [vmem:[#allocation8 + $0x50] sm:$0xff]
    %v712 = vld [vmem:[#allocation8 + $0x58] sm:$0xff]
    %v713 = vld [vmem:[#allocation8 + $0x60] sm:$0xff]
    %v714 = vld [vmem:[#allocation8 + $0x68] sm:$0xff]
    %v715 = vld [vmem:[#allocation8 + $0x70] sm:$0xff]
    %v716 = vld [vmem:[#allocation8 + $0x78] sm:$0xff]
    %v717 = vld [vmem:[#allocation8 + $0x80] sm:$0xff]
    %v718 = vld [vmem:[#allocation8 + $0x88] sm:$0xff]
    %v719 = vld [vmem:[#allocation8 + $0x90] sm:$0xff]
    %v720 = vld [vmem:[#allocation8 + $0x98] sm:$0xff]
    %v721 = vld [vmem:[#allocation8 + $0xa0] sm:$0xff]
    %v722 = vld [vmem:[#allocation8 + $0xa8] sm:$0xff]
    %v723 = vld [vmem:[#allocation8 + $0xb0] sm:$0xff]
    %v724 = vld [vmem:[#allocation8 + $0xb8] sm:$0xff]
    %v725 = vld [vmem:[#allocation8 + $0xc0] sm:$0xff]
    %v726 = vld [vmem:[#allocation8 + $0xc8] sm:$0xff]
    %v727 = vld [vmem:[#allocation8 + $0xd0] sm:$0xff]
    %v728 = vld [vmem:[#allocation8 + $0xd8] sm:$0xff]
    %v729 = vld [vmem:[#allocation8 + $0xe0] sm:$0xff]
    %v730 = vld [vmem:[#allocation8 + $0xe8] sm:$0xff]
    %v731 = vld [vmem:[#allocation8 + $0xf0] sm:$0xff]
    %v732 = vld [vmem:[#allocation8 + $0xf8] sm:$0xff]
    %v733 = vld [vmem:[#allocation8 + $0x100] sm:$0xff]
    %v734 = vld [vmem:[#allocation8 + $0x108] sm:$0xff]
    %v735 = vld [vmem:[#allocation8 + $0x110] sm:$0xff]
    %v736 = vld [vmem:[#allocation8 + $0x118] sm:$0xff]
    %v737 = vld [vmem:[#allocation8 + $0x120] sm:$0xff]
    %v738 = vld [vmem:[#allocation8 + $0x128] sm:$0xff]
    %v739 = vld [vmem:[#allocation8 + $0x130] sm:$0xff]
    %v740 = vld [vmem:[#allocation8 + $0x138] sm:$0xff]
    %v741 = vld [vmem:[#allocation8 + $0x140] sm:$0xff]
    %v742 = vld [vmem:[#allocation8 + $0x148] sm:$0xff]
    %v743 = vld [vmem:[#allocation8 + $0x150] sm:$0xff]
    %v744 = vld [vmem:[#allocation8 + $0x158] sm:$0xff]
    %v745 = vld [vmem:[#allocation8 + $0x160] sm:$0xff]
    %v746 = vld [vmem:[#allocation8 + $0x168] sm:$0xff]
    %v747 = vld [vmem:[#allocation8 + $0x170] sm:$0xff]
    %v748 = vld [vmem:[#allocation8 + $0x178] sm:$0xff]
    %v749 = vld [vmem:[#allocation8 + $0x180] sm:$0xff]
    %v750 = vld [vmem:[#allocation8 + $0x188] sm:$0xff]
    %v751 = vld [vmem:[#allocation8 + $0x190] sm:$0xff]
    %v752 = vld [vmem:[#allocation8 + $0x198] sm:$0xff]
    %v753 = vld [vmem:[#allocation8 + $0x1a0] sm:$0xff]
    %v754 = vld [vmem:[#allocation8 + $0x1a8] sm:$0xff]
    %v755 = vld [vmem:[#allocation8 + $0x1b0] sm:$0xff]
    %v756 = vld [vmem:[#allocation8 + $0x1b8] sm:$0xff]
    %v757 = vld [vmem:[#allocation8 + $0x1c0] sm:$0xff]
    %v758 = vld [vmem:[#allocation8 + $0x1c8] sm:$0xff]
    %v759 = vld [vmem:[#allocation8 + $0x1d0] sm:$0xff]
    %v760 = vld [vmem:[#allocation8 + $0x1d8] sm:$0xff]
    %v761 = vld [vmem:[#allocation8 + $0x1e0] sm:$0xff]
    %v762 = vld [vmem:[#allocation8 + $0x1e8] sm:$0xff]
    %v763 = vld [vmem:[#allocation8 + $0x1f0] sm:$0xff]
    %v764 = vld [vmem:[#allocation8 + $0x1f8] sm:$0xff]
    %765 = vmatprep.subr.mxu0 %v702
    %766 = vmatpush1.msra.mxu0 %v701
    %767 = vmatprep.subr.mxu0 %v704
    %768 = vmatpush1.msra.mxu0 %v703
    %769 = vmatprep.subr.mxu0 %v706
    %770 = vmatpush1.msra.mxu0 %v705
    %771 = vmatprep.subr.mxu0 %v708
    %772 = vmatpush1.msra.mxu0 %v707
    %773 = vmatprep.subr.mxu0 %v710
    %774 = vmatpush1.msra.mxu0 %v709
    %775 = vmatprep.subr.mxu0 %v712
    %776 = vmatpush1.msra.mxu0 %v711
    %777 = vmatprep.subr.mxu0 %v714
    %778 = vmatpush1.msra.mxu0 %v713
    %779 = vmatprep.subr.mxu0 %v716
    %780 = vmatpush1.msra.mxu0 %v715
    %781 = vmatprep.subr.mxu0 %v718
    %782 = vmatpush1.msra.mxu0 %v717
    %783 = vmatprep.subr.mxu0 %v720
    %784 = vmatpush1.msra.mxu0 %v719
    %785 = vmatprep.subr.mxu0 %v722
    %786 = vmatpush1.msra.mxu0 %v721
    %787 = vmatprep.subr.mxu0 %v724
    %788 = vmatpush1.msra.mxu0 %v723
    %789 = vmatprep.subr.mxu0 %v726
    %790 = vmatpush1.msra.mxu0 %v725
    %791 = vmatprep.subr.mxu0 %v728
    %792 = vmatpush1.msra.mxu0 %v727
    %793 = vmatprep.subr.mxu0 %v730
    %794 = vmatpush1.msra.mxu0 %v729
    %795 = vmatprep.subr.mxu0 %v732
    %796 = vmatpush1.msra.mxu0 %v731
    %797 = vmatprep.subr.mxu0 %v734
    %798 = vmatpush1.msra.mxu0 %v733
    %799 = vmatprep.subr.mxu0 %v736
    %800 = vmatpush1.msra.mxu0 %v735
    %801 = vmatprep.subr.mxu0 %v738
    %802 = vmatpush1.msra.mxu0 %v737
    %803 = vmatprep.subr.mxu0 %v740
    %804 = vmatpush1.msra.mxu0 %v739
    %805 = vmatprep.subr.mxu0 %v742
    %806 = vmatpush1.msra.mxu0 %v741
    %807 = vmatprep.subr.mxu0 %v744
    %808 = vmatpush1.msra.mxu0 %v743
    %809 = vmatprep.subr.mxu0 %v746
    %810 = vmatpush1.msra.mxu0 %v745
    %811 = vmatprep.subr.mxu0 %v748
    %812 = vmatpush1.msra.mxu0 %v747
    %813 = vmatprep.subr.mxu0 %v750
    %814 = vmatpush1.msra.mxu0 %v749
    %815 = vmatprep.subr.mxu0 %v752
    %816 = vmatpush1.msra.mxu0 %v751
    %817 = vmatprep.subr.mxu0 %v754
    %818 = vmatpush1.msra.mxu0 %v753
    %819 = vmatprep.subr.mxu0 %v756
    %820 = vmatpush1.msra.mxu0 %v755
    %821 = vmatprep.subr.mxu0 %v758
    %822 = vmatpush1.msra.mxu0 %v757
    %823 = vmatprep.subr.mxu0 %v760
    %824 = vmatpush1.msra.mxu0 %v759
    %825 = vmatprep.subr.mxu0 %v762
    %826 = vmatpush1.msra.mxu0 %v761
    %827 = vmatprep.subr.mxu0 %v764
    %828 = vmatpush1.msra.mxu0 %v763
    %829 = vmatprep.mubr.f32.mxu0 %v698
    %830 = vmatmul.mubr.f32.gmra.mrb[0].mxu0 %v697
    %v831 = vpop.f32.mrb[0].mxu0
    %v832 = vadd.f32 0.0, %v831
    %v833 = vpop.f32.mrb[0].mxu0
    %v834 = vadd.f32 0.0, %v833
    %835 = vmatprep.mubr.f32.mxu0 %v700
    %836 = vmatmul.mubr.f32.gmra.mrb[0].mxu0 %v699
    %v837 = vpop.f32.mrb[0].mxu0
    %v838 = vadd.f32 0.0, %v837
    %v839 = vpop.f32.mrb[0].mxu0
    %v840 = vadd.f32 0.0, %v839
    %841 = vdwg.mxu0
    %v842 = vadd.f32 %v349, %v832
    %v843 = vadd.f32 %v351, %v834
    %v844 = vadd.f32 %v355, %v838
    %v845 = vadd.f32 %v357, %v840
    %v846 = vtanh.pop %v842
    %v847 = vtanh.pop %v843
    %v848 = vtanh.pop %v844
    %v849 = vtanh.pop %v845
    %v850 = vsub.f32 1.0, %v666
    %v851 = vsub.f32 1.0, %v668
    %v852 = vsub.f32 1.0, %v670
    %v853 = vsub.f32 1.0, %v672
    %v854 = vmul.f32 %v79, %v850
    %v855 = vmul.f32 %v80, %v851
    %v856 = vmul.f32 %v81, %v852
    %v857 = vmul.f32 %v82, %v853
    %v858 = vmul.f32 %v846, %v666
    %v859 = vmul.f32 %v847, %v668
    %v860 = vmul.f32 %v848, %v670
    %v861 = vmul.f32 %v849, %v672
    %v862 = vadd.f32 %v854, %v858
    %v863 = vadd.f32 %v855, %v859
    %v864 = vadd.f32 %v856, %v860
    %v865 = vadd.f32 %v857, %v861
    %866 = vst [vmem:[#allocation10] sm:$0xff] %v862
    %867 = vst [vmem:[#allocation10 + $0x8] sm:$0xff] %v863
    %868 = vst [vmem:[#allocation10 + $0x10] sm:$0xff] %v864
    %869 = vst [vmem:[#allocation10 + $0x18] sm:$0xff] %v865
    // Predicated region
    $region42: #{tpu_custom_call.1} parent=1 // pred_check
      _
    $region43: #{tpu_custom_call.1} parent=1 // pred_check_branch
      %871 = sbr.rel (0) target = $region45
    $region44: #{tpu_custom_call.1} parent=1 // pred_region
      %s873 = ssub.s32 512, 512
      %874 = vsyncadd [#allocation4], %s873
      %s875 = sshll.u32 [#allocation10], 4
      %s876 = int_to_ptr.vmem [resolvable:$true] %s875
      %881 = dma.vmem_to_hbm [thread:$0]  %s876, 512, %s6, [#allocation4], 256, 256, 16
    $region45: #{tpu_custom_call.1} parent=1 // pred_fallthru
      _
    // Predicated region
    $region46: #{tpu_custom_call.1} parent=1 // pred_check
      _
    $region47: #{tpu_custom_call.1} parent=1 // pred_check_branch
      %883 = sbr.rel (0) target = $region49
    $region48: #{tpu_custom_call.1} parent=1 // pred_region
      %884 = dma.done [#allocation4], 512
    $region49: #{tpu_custom_call.1} parent=1 // pred_fallthru
      _
    %885 = vsyncpa [#allocation3], 1
    %886 = vsyncpa [#allocation6], 1
    %887 = vsyncpa [#allocation9], 1
    %888 = vsyncpa [#allocation4], 1

// kernel: tpu_custom_call.1
$region0: #{tpu_custom_call.1}
  #allocation0 [shape = 'u32[]', space=smem, size = 0x4, offset = 0x4, fixed_abs, tag = 'smem constant byte address 0x4 - core index']
  #allocation1 [shape = 'u32[144,128]{1,0:T(1,128)}', space=vmem, size = 0x12000, scoped, tag = 'internal scratch']
  %s0 = inlined_call_operand.vmem [shape: f32[16,8], index: 0, kind: input, shape index: {}]
  %s1 = inlined_call_operand.hbm [shape: f32[16,256], index: 1, kind: input, shape index: {}]
  %s2 = inlined_call_operand.hbm [shape: f32[8,768], index: 2, kind: input, shape index: {}]
  %s3 = inlined_call_operand.hbm [shape: f32[256,512], index: 3, kind: input, shape index: {}]
  %s4 = inlined_call_operand.hbm [shape: f32[256,256], index: 4, kind: input, shape index: {}]
  %s5 = inlined_call_operand.vmem [shape: f32[1,768], index: 5, kind: input, shape index: {}]
  %s6 = inlined_call_operand.hbm [shape: f32[16,256], index: 6, kind: output, shape index: {}]
  %s7 = sld [smem:[#allocation0]]
  $region50: #{tpu_custom_call.1} parent=0
    _
  %s9 = ssub.s32 1, %s7
  %s10 = scalar_select 0, %s9, %s7
  $region1: #{tpu_custom_call.1} parent=0
    #allocation2 [shape = 'u8[16384]{0}', space=vmem, size = 0x4000, scoped, tag = 'input window, operand 1, single buffered']
    #allocation3 [shape = 's32[1]{0}', space=sflag, size = 0x4, scoped, tag = 'scoped memory for tpu_custom_call.1']
    #allocation4 [shape = 's32[1]{0}', space=sflag, size = 0x4, scoped, tag = 'scoped memory for tpu_custom_call.1']
    #allocation5 [shape = 'u8[24576]{0}', space=vmem, size = 0x6000, scoped, tag = 'input window, operand 2, single buffered']
    #allocation6 [shape = 's32[1]{0}', space=sflag, size = 0x4, scoped, tag = 'scoped memory for tpu_custom_call.1']
    #allocation7 [shape = 'u8[524288]{0}', space=vmem, size = 0x80000, scoped, tag = 'input window, operand 3, single buffered']
    #allocation8 [shape = 'u8[262144]{0}', space=vmem, size = 0x40000, scoped, tag = 'input window, operand 4, single buffered']
    #allocation9 [shape = 's32[1]{0}', space=sflag, size = 0x4, scoped, tag = 'scoped memory for tpu_custom_call.1']
    #allocation10 [shape = 'u8[16384]{0}', space=vmem, size = 0x4000, scoped, tag = 'output window, operand 0, single buffered']
    %11 = vsyncpa [#allocation3], 0
    %12 = vsyncpa [#allocation6], 0
    %13 = vsyncpa [#allocation9], 0
    %14 = vsyncpa [#allocation4], 0
    // Predicated region
    $region2: #{tpu_custom_call.1} parent=1 // pred_check
      _
    $region3: #{tpu_custom_call.1} parent=1 // pred_check_branch
      %16 = sbr.rel (0) target = $region5
    $region4: #{tpu_custom_call.1} parent=1 // pred_region
      _
    $region5: #{tpu_custom_call.1} parent=1 // pred_fallthru
      _
    // Predicated region
    $region6: #{tpu_custom_call.1} parent=1 // pred_check
      _
    $region7: #{tpu_custom_call.1} parent=1 // pred_check_branch
      %18 = sbr.rel (0) target = $region9
    $region8: #{tpu_custom_call.1} parent=1 // pred_region
      %s20 = ssub.s32 512, 512
      %21 = vsyncadd [#allocation3], %s20
      %s22 = sshll.u32 [#allocation2], 4
      %s23 = int_to_ptr.vmem [resolvable:$true] %s22
      %28 = dma.hbm_to_vmem [thread:$0]  %s1, 512, %s23, [#allocation3], 256, 256, 16
    $region9: #{tpu_custom_call.1} parent=1 // pred_fallthru
      _
    // Predicated region
    $region10: #{tpu_custom_call.1} parent=1 // pred_check
      _
    $region11: #{tpu_custom_call.1} parent=1 // pred_check_branch
      %30 = sbr.rel (0) target = $region13
    $region12: #{tpu_custom_call.1} parent=1 // pred_region
      %s32 = ssub.s32 768, 768
      %33 = vsyncadd [#allocation6], %s32
      %s35 = sshll.u32 [#allocation5], 4
      %s36 = int_to_ptr.vmem [resolvable:$true] %s35
      %38 = dma.hbm_to_vmem [thread:$0]  %s2, 768, %s36, [#allocation6]
    $region13: #{tpu_custom_call.1} parent=1 // pred_fallthru
      _
    // Predicated region
    $region14: #{tpu_custom_call.1} parent=1 // pred_check
      _
    $region15: #{tpu_custom_call.1} parent=1 // pred_check_branch
      %40 = sbr.rel (0) target = $region17
    $region16: #{tpu_custom_call.1} parent=1 // pred_region
      %s42 = ssub.s32 16384, 16384
      %43 = vsyncadd [#allocation6], %s42
      %s44 = sshll.u32 [#allocation7], 4
      %s45 = int_to_ptr.vmem [resolvable:$true] %s44
      %50 = dma.hbm_to_vmem [thread:$0]  %s3, 16384, %s45, [#allocation6], 512, 512, 32
    $region17: #{tpu_custom_call.1} parent=1 // pred_fallthru
      _
    // Predicated region
    $region18: #{tpu_custom_call.1} parent=1 // pred_check
      _
    $region19: #{tpu_custom_call.1} parent=1 // pred_check_branch
      %52 = sbr.rel (0) target = $region21
    $region20: #{tpu_custom_call.1} parent=1 // pred_region
      %s54 = ssub.s32 8192, 8192
      %55 = vsyncadd [#allocation9], %s54
      %s56 = sshll.u32 [#allocation8], 4
      %s57 = int_to_ptr.vmem [resolvable:$true] %s56
      %62 = dma.hbm_to_vmem [thread:$0]  %s4, 8192, %s57, [#allocation9], 256, 256, 16
    $region21: #{tpu_custom_call.1} parent=1 // pred_fallthru
      _
    // Predicated region
    $region22: #{tpu_custom_call.1} parent=1 // pred_check
      _
    $region23: #{tpu_custom_call.1} parent=1 // pred_check_branch
      %64 = sbr.rel (0) target = $region25
    $region24: #{tpu_custom_call.1} parent=1 // pred_region
      _
    $region25: #{tpu_custom_call.1} parent=1 // pred_fallthru
      _
    // Predicated region
    $region26: #{tpu_custom_call.1} parent=1 // pred_check
      _
    $region27: #{tpu_custom_call.1} parent=1 // pred_check_branch
      %66 = sbr.rel (0) target = $region29
    $region28: #{tpu_custom_call.1} parent=1 // pred_region
      %67 = dma.done [#allocation3], 512
    $region29: #{tpu_custom_call.1} parent=1 // pred_fallthru
      _
    // Predicated region
    $region30: #{tpu_custom_call.1} parent=1 // pred_check
      _
    $region31: #{tpu_custom_call.1} parent=1 // pred_check_branch
      %69 = sbr.rel (0) target = $region33
    $region32: #{tpu_custom_call.1} parent=1 // pred_region
      %70 = dma.done [#allocation6], 768
    $region33: #{tpu_custom_call.1} parent=1 // pred_fallthru
      _
    // Predicated region
    $region34: #{tpu_custom_call.1} parent=1 // pred_check
      _
    $region35: #{tpu_custom_call.1} parent=1 // pred_check_branch
      %72 = sbr.rel (0) target = $region37
    $region36: #{tpu_custom_call.1} parent=1 // pred_region
      %73 = dma.done [#allocation6], 16384
    $region37: #{tpu_custom_call.1} parent=1 // pred_fallthru
      _
    // Predicated region
    $region38: #{tpu_custom_call.1} parent=1 // pred_check
      _
    $region39: #{tpu_custom_call.1} parent=1 // pred_check_branch
      %75 = sbr.rel (0) target = $region41
    $region40: #{tpu_custom_call.1} parent=1 // pred_region
      %76 = dma.done [#allocation9], 8192
    $region41: #{tpu_custom_call.1} parent=1 // pred_fallthru
      _
    %v77 = vld [vmem:[%s0] sm:$0xff]
    %v78 = vld [vmem:[%s0 + $0x8] sm:$0xff]
    %v79 = vld [vmem:[#allocation2] sm:$0xff]
    %v80 = vld [vmem:[#allocation2 + $0x8] sm:$0xff]
    %v81 = vld [vmem:[#allocation2 + $0x10] sm:$0xff]
    %v82 = vld [vmem:[#allocation2 + $0x18] sm:$0xff]
    %v83 = vld [vmem:[#allocation5] sm:$0xff]
    %v84 = vld [vmem:[#allocation5 + $0x8] sm:$0xff]
    %v85 = vld [vmem:[#allocation5 + $0x10] sm:$0xff]
    %v86 = vld [vmem:[#allocation5 + $0x18] sm:$0xff]
    %v87 = vld [vmem:[#allocation5 + $0x20] sm:$0xff]
    %v88 = vld [vmem:[#allocation5 + $0x28] sm:$0xff]
    %v89 = vld [vmem:[%s5] sm:$0x3f]
    %v91 = vlaneseq
    %v92 = vshrl.u32 %v91, 7
    %v93 = vsub.s32 0, %v92
    %v94 = vrot.slane %v89, %v93
    %v95 = vlaneseq
    %v96 = vshrl.u32 %v95, 7
    %v97 = vsub.s32 1, %v96
    %v98 = vrot.slane %v89, %v97
    %v99 = vlaneseq
    %v100 = vshrl.u32 %v99, 7
    %v101 = vsub.s32 2, %v100
    %v102 = vrot.slane %v89, %v101
    %v103 = vlaneseq
    %v104 = vshrl.u32 %v103, 7
    %v105 = vsub.s32 3, %v104
    %v106 = vrot.slane %v89, %v105
    %v107 = vlaneseq
    %v108 = vshrl.u32 %v107, 7
    %v109 = vsub.s32 4, %v108
    %v110 = vrot.slane %v89, %v109
    %v111 = vlaneseq
    %v112 = vshrl.u32 %v111, 7
    %v113 = vsub.s32 5, %v112
    %v114 = vrot.slane %v89, %v113
    %vm121 = vcmask 64512
    %v123 = vsel %vm121, %v77, 0
    %v126 = vsel %vm121, %v78, 0
    %128 = vmatprep.subr.mxu0 %v84
    %129 = vmatpush1.msra.mxu0 %v83
    %130 = vmatprep.subr.mxu0 0.0
    %131 = vmatpush1.msra.mxu0 0.0
    %132 = vmatprep.subr.mxu0 0.0
    %133 = vmatpush1.msra.mxu0 0.0
    %134 = vmatprep.subr.mxu0 0.0
    %135 = vmatpush1.msra.mxu0 0.0
    %136 = vmatprep.subr.mxu0 0.0
    %137 = vmatpush1.msra.mxu0 0.0
    %138 = vmatprep.subr.mxu0 0.0
    %139 = vmatpush1.msra.mxu0 0.0
    %140 = vmatprep.subr.mxu0 0.0
    %141 = vmatpush1.msra.mxu0 0.0
    %142 = vmatprep.subr.mxu0 0.0
    %143 = vmatpush1.msra.mxu0 0.0
    %144 = vmatprep.subr.mxu0 0.0
    %145 = vmatpush1.msra.mxu0 0.0
    %146 = vmatprep.subr.mxu0 0.0
    %147 = vmatpush1.msra.mxu0 0.0
    %148 = vmatprep.subr.mxu0 0.0
    %149 = vmatpush1.msra.mxu0 0.0
    %150 = vmatprep.subr.mxu0 0.0
    %151 = vmatpush1.msra.mxu0 0.0
    %152 = vmatprep.subr.mxu0 0.0
    %153 = vmatpush1.msra.mxu0 0.0
    %154 = vmatprep.subr.mxu0 0.0
    %155 = vmatpush1.msra.mxu0 0.0
    %156 = vmatprep.subr.mxu0 0.0
    %157 = vmatpush1.msra.mxu0 0.0
    %158 = vmatprep.subr.mxu0 0.0
    %159 = vmatpush1.msra.mxu0 0.0
    %160 = vmatprep.subr.mxu0 0.0
    %161 = vmatpush1.msra.mxu0 0.0
    %162 = vmatprep.subr.mxu0 0.0
    %163 = vmatpush1.msra.mxu0 0.0
    %164 = vmatprep.subr.mxu0 0.0
    %165 = vmatpush1.msra.mxu0 0.0
    %166 = vmatprep.subr.mxu0 0.0
    %167 = vmatpush1.msra.mxu0 0.0
    %168 = vmatprep.subr.mxu0 0.0
    %169 = vmatpush1.msra.mxu0 0.0
    %170 = vmatprep.subr.mxu0 0.0
    %171 = vmatpush1.msra.mxu0 0.0
    %172 = vmatprep.subr.mxu0 0.0
    %173 = vmatpush1.msra.mxu0 0.0
    %174 = vmatprep.subr.mxu0 0.0
    %175 = vmatpush1.msra.mxu0 0.0
    %176 = vmatprep.subr.mxu0 0.0
    %177 = vmatpush1.msra.mxu0 0.0
    %178 = vmatprep.subr.mxu0 0.0
    %179 = vmatpush1.msra.mxu0 0.0
    %180 = vmatprep.subr.mxu0 0.0
    %181 = vmatpush1.msra.mxu0 0.0
    %182 = vmatprep.subr.mxu0 0.0
    %183 = vmatpush1.msra.mxu0 0.0
    %184 = vmatprep.subr.mxu0 0.0
    %185 = vmatpush1.msra.mxu0 0.0
    %186 = vmatprep.subr.mxu0 0.0
    %187 = vmatpush1.msra.mxu0 0.0
    %188 = vmatprep.subr.mxu0 0.0
    %189 = vmatpush1.msra.mxu0 0.0
    %190 = vmatprep.subr.mxu0 0.0
    %191 = vmatpush1.msra.mxu0 0.0
    %192 = vmatprep.mubr.f32.mxu0 0.0
    %193 = vmatmul.mubr.f32.gmra.mrb[0].mxu0 %v123
    %v194 = vpop.f32.mrb[0].mxu0
    %v195 = vadd.f32 %v94, %v194
    %v196 = vpop.f32.mrb[0].mxu0
    %v197 = vadd.f32 %v98, %v196
    %198 = vmatprep.mubr.f32.mxu0 0.0
    %199 = vmatmul.mubr.f32.gmra.mrb[0].mxu0 %v126
    %v200 = vpop.f32.mrb[0].mxu0
    %v201 = vadd.f32 %v94, %v200
    %v202 = vpop.f32.mrb[0].mxu0
    %v203 = vadd.f32 %v98, %v202
    %204 = vdwg.mxu0
    %205 = vmatprep.subr.mxu0 %v86
    %206 = vmatpush1.msra.mxu0 %v85
    %207 = vmatprep.subr.mxu0 0.0
    %208 = vmatpush1.msra.mxu0 0.0
    %209 = vmatprep.subr.mxu0 0.0
    %210 = vmatpush1.msra.mxu0 0.0
    %211 = vmatprep.subr.mxu0 0.0
    %212 = vmatpush1.msra.mxu0 0.0
    %213 = vmatprep.subr.mxu0 0.0
    %214 = vmatpush1.msra.mxu0 0.0
    %215 = vmatprep.subr.mxu0 0.0
    %216 = vmatpush1.msra.mxu0 0.0
    %217 = vmatprep.subr.mxu0 0.0
    %218 = vmatpush1.msra.mxu0 0.0
    %219 = vmatprep.subr.mxu0 0.0
    %220 = vmatpush1.msra.mxu0 0.0
    %221 = vmatprep.subr.mxu0 0.0
    %222 = vmatpush1.msra.mxu0 0.0
    %223 = vmatprep.subr.mxu0 0.0
    %224 = vmatpush1.msra.mxu0 0.0
    %225 = vmatprep.subr.mxu0 0.0
    %226 = vmatpush1.msra.mxu0 0.0
    %227 = vmatprep.subr.mxu0 0.0
    %228 = vmatpush1.msra.mxu0 0.0
    %229 = vmatprep.subr.mxu0 0.0
    %230 = vmatpush1.msra.mxu0 0.0
    %231 = vmatprep.subr.mxu0 0.0
    %232 = vmatpush1.msra.mxu0 0.0
    %233 = vmatprep.subr.mxu0 0.0
    %234 = vmatpush1.msra.mxu0 0.0
    %235 = vmatprep.subr.mxu0 0.0
    %236 = vmatpush1.msra.mxu0 0.0
    %237 = vmatprep.subr.mxu0 0.0
    %238 = vmatpush1.msra.mxu0 0.0
    %239 = vmatprep.subr.mxu0 0.0
    %240 = vmatpush1.msra.mxu0 0.0
    %241 = vmatprep.subr.mxu0 0.0
    %242 = vmatpush1.msra.mxu0 0.0
    %243 = vmatprep.subr.mxu0 0.0
    %244 = vmatpush1.msra.mxu0 0.0
    %245 = vmatprep.subr.mxu0 0.0
    %246 = vmatpush1.msra.mxu0 0.0
    %247 = vmatprep.subr.mxu0 0.0
    %248 = vmatpush1.msra.mxu0 0.0
    %249 = vmatprep.subr.mxu0 0.0
    %250 = vmatpush1.msra.mxu0 0.0
    %251 = vmatprep.subr.mxu0 0.0
    %252 = vmatpush1.msra.mxu0 0.0
    %253 = vmatprep.subr.mxu0 0.0
    %254 = vmatpush1.msra.mxu0 0.0
    %255 = vmatprep.subr.mxu0 0.0
    %256 = vmatpush1.msra.mxu0 0.0
    %257 = vmatprep.subr.mxu0 0.0
    %258 = vmatpush1.msra.mxu0 0.0
    %259 = vmatprep.subr.mxu0 0.0
    %260 = vmatpush1.msra.mxu0 0.0
    %261 = vmatprep.subr.mxu0 0.0
    %262 = vmatpush1.msra.mxu0 0.0
    %263 = vmatprep.subr.mxu0 0.0
    %264 = vmatpush1.msra.mxu0 0.0
    %265 = vmatprep.subr.mxu0 0.0
    %266 = vmatpush1.msra.mxu0 0.0
    %267 = vmatprep.subr.mxu0 0.0
    %268 = vmatpush1.msra.mxu0 0.0
    %269 = vmatprep.mubr.f32.mxu0 0.0
    %270 = vmatmul.mubr.f32.gmra.mrb[0].mxu0 %v123
    %v271 = vpop.f32.mrb[0].mxu0
    %v272 = vadd.f32 %v102, %v271
    %v273 = vpop.f32.mrb[0].mxu0
    %v274 = vadd.f32 %v106, %v273
    %275 = vmatprep.mubr.f32.mxu0 0.0
    %276 = vmatmul.mubr.f32.gmra.mrb[0].mxu0 %v126
    %v277 = vpop.f32.mrb[0].mxu0
    %v278 = vadd.f32 %v102, %v277
    %v279 = vpop.f32.mrb[0].mxu0
    %v280 = vadd.f32 %v106, %v279
    %281 = vdwg.mxu0
    %282 = vmatprep.subr.mxu0 %v88
    %283 = vmatpush1.msra.mxu0 %v87
    %284 = vmatprep.subr.mxu0 0.0
    %285 = vmatpush1.msra.mxu0 0.0
    %286 = vmatprep.subr.mxu0 0.0
    %287 = vmatpush1.msra.mxu0 0.0
    %288 = vmatprep.subr.mxu0 0.0
    %289 = vmatpush1.msra.mxu0 0.0
    %290 = vmatprep.subr.mxu0 0.0
    %291 = vmatpush1.msra.mxu0 0.0
    %292 = vmatprep.subr.mxu0 0.0
    %293 = vmatpush1.msra.mxu0 0.0
    %294 = vmatprep.subr.mxu0 0.0
    %295 = vmatpush1.msra.mxu0 0.0
    %296 = vmatprep.subr.mxu0 0.0
    %297 = vmatpush1.msra.mxu0 0.0
    %298 = vmatprep.subr.mxu0 0.0
    %299 = vmatpush1.msra.mxu0 0.0
    %300 = vmatprep.subr.mxu0 0.0
    %301 = vmatpush1.msra.mxu0 0.0
    %302 = vmatprep.subr.mxu0 0.0
    %303 = vmatpush1.msra.mxu0 0.0
    %304 = vmatprep.subr.mxu0 0.0
    %305 = vmatpush1.msra.mxu0 0.0
    %306 = vmatprep.subr.mxu0 0.0
    %307 = vmatpush1.msra.mxu0 0.0
    %308 = vmatprep.subr.mxu0 0.0
    %309 = vmatpush1.msra.mxu0 0.0
    %310 = vmatprep.subr.mxu0 0.0
    %311 = vmatpush1.msra.mxu0 0.0
    %312 = vmatprep.subr.mxu0 0.0
    %313 = vmatpush1.msra.mxu0 0.0
    %314 = vmatprep.subr.mxu0 0.0
    %315 = vmatpush1.msra.mxu0 0.0
    %316 = vmatprep.subr.mxu0 0.0
    %317 = vmatpush1.msra.mxu0 0.0
    %318 = vmatprep.subr.mxu0 0.0
    %319 = vmatpush1.msra.mxu0 0.0
    %320 = vmatprep.subr.mxu0 0.0
    %321 = vmatpush1.msra.mxu0 0.0
    %322 = vmatprep.subr.mxu0 0.0
    %323 = vmatpush1.msra.mxu0 0.0
    %324 = vmatprep.subr.mxu0 0.0
    %325 = vmatpush1.msra.mxu0 0.0
    %326 = vmatprep.subr.mxu0 0.0
    %327 = vmatpush1.msra.mxu0 0.0
    %328 = vmatprep.subr.mxu0 0.0
    %329 = vmatpush1.msra.mxu0 0.0
    %330 = vmatprep.subr.mxu0 0.0
    %331 = vmatpush1.msra.mxu0 0.0
    %332 = vmatprep.subr.mxu0 0.0
    %333 = vmatpush1.msra.mxu0 0.0
    %334 = vmatprep.subr.mxu0 0.0
    %335 = vmatpush1.msra.mxu0 0.0
    %336 = vmatprep.subr.mxu0 0.0
    %337 = vmatpush1.msra.mxu0 0.0
    %338 = vmatprep.subr.mxu0 0.0
    %339 = vmatpush1.msra.mxu0 0.0
    %340 = vmatprep.subr.mxu0 0.0
    %341 = vmatpush1.msra.mxu0 0.0
    %342 = vmatprep.subr.mxu0 0.0
    %343 = vmatpush1.msra.mxu0 0.0
    %344 = vmatprep.subr.mxu0 0.0
    %345 = vmatpush1.msra.mxu0 0.0
    %346 = vmatprep.mubr.f32.mxu0 0.0
    %347 = vmatmul.mubr.f32.gmra.mrb[0].mxu0 %v123
    %v348 = vpop.f32.mrb[0].mxu0
    %v349 = vadd.f32 %v110, %v348
    %v350 = vpop.f32.mrb[0].mxu0
    %v351 = vadd.f32 %v114, %v350
    %352 = vmatprep.mubr.f32.mxu0 0.0
    %353 = vmatmul.mubr.f32.gmra.mrb[0].mxu0 %v126
    %v354 = vpop.f32.mrb[0].mxu0
    %v355 = vadd.f32 %v110, %v354
    %v356 = vpop.f32.mrb[0].mxu0
    %v357 = vadd.f32 %v114, %v356
    %358 = vdwg.mxu0
    %v359 = vld [vmem:[#allocation7] sm:$0xff]
    %v360 = vld [vmem:[#allocation7 + $0x8] sm:$0xff]
    %v361 = vld [vmem:[#allocation7 + $0x10] sm:$0xff]
    %v362 = vld [vmem:[#allocation7 + $0x18] sm:$0xff]
    %v363 = vld [vmem:[#allocation7 + $0x20] sm:$0xff]
    %v364 = vld [vmem:[#allocation7 + $0x28] sm:$0xff]
    %v365 = vld [vmem:[#allocation7 + $0x30] sm:$0xff]
    %v366 = vld [vmem:[#allocation7 + $0x38] sm:$0xff]
    %v367 = vld [vmem:[#allocation7 + $0x40] sm:$0xff]
    %v368 = vld [vmem:[#allocation7 + $0x48] sm:$0xff]
    %v369 = vld [vmem:[#allocation7 + $0x50] sm:$0xff]
    %v370 = vld [vmem:[#allocation7 + $0x58] sm:$0xff]
    %v371 = vld [vmem:[#allocation7 + $0x60] sm:$0xff]
    %v372 = vld [vmem:[#allocation7 + $0x68] sm:$0xff]
    %v373 = vld [vmem:[#allocation7 + $0x70] sm:$0xff]
    %v374 = vld [vmem:[#allocation7 + $0x78] sm:$0xff]
    %v375 = vld [vmem:[#allocation7 + $0x80] sm:$0xff]
    %v376 = vld [vmem:[#allocation7 + $0x88] sm:$0xff]
    %v377 = vld [vmem:[#allocation7 + $0x90] sm:$0xff]
    %v378 = vld [vmem:[#allocation7 + $0x98] sm:$0xff]
    %v379 = vld [vmem:[#allocation7 + $0xa0] sm:$0xff]
    %v380 = vld [vmem:[#allocation7 + $0xa8] sm:$0xff]
    %v381 = vld [vmem:[#allocation7 + $0xb0] sm:$0xff]
    %v382 = vld [vmem:[#allocation7 + $0xb8] sm:$0xff]
    %v383 = vld [vmem:[#allocation7 + $0xc0] sm:$0xff]
    %v384 = vld [vmem:[#allocation7 + $0xc8] sm:$0xff]
    %v385 = vld [vmem:[#allocation7 + $0xd0] sm:$0xff]
    %v386 = vld [vmem:[#allocation7 + $0xd8] sm:$0xff]
    %v387 = vld [vmem:[#allocation7 + $0xe0] sm:$0xff]
    %v388 = vld [vmem:[#allocation7 + $0xe8] sm:$0xff]
    %v389 = vld [vmem:[#allocation7 + $0xf0] sm:$0xff]
    %v390 = vld [vmem:[#allocation7 + $0xf8] sm:$0xff]
    %v391 = vld [vmem:[#allocation7 + $0x100] sm:$0xff]
    %v392 = vld [vmem:[#allocation7 + $0x108] sm:$0xff]
    %v393 = vld [vmem:[#allocation7 + $0x110] sm:$0xff]
    %v394 = vld [vmem:[#allocation7 + $0x118] sm:$0xff]
    %v395 = vld [vmem:[#allocation7 + $0x120] sm:$0xff]
    %v396 = vld [vmem:[#allocation7 + $0x128] sm:$0xff]
    %v397 = vld [vmem:[#allocation7 + $0x130] sm:$0xff]
    %v398 = vld [vmem:[#allocation7 + $0x138] sm:$0xff]
    %v399 = vld [vmem:[#allocation7 + $0x140] sm:$0xff]
    %v400 = vld [vmem:[#allocation7 + $0x148] sm:$0xff]
    %v401 = vld [vmem:[#allocation7 + $0x150] sm:$0xff]
    %v402 = vld [vmem:[#allocation7 + $0x158] sm:$0xff]
    %v403 = vld [vmem:[#allocation7 + $0x160] sm:$0xff]
    %v404 = vld [vmem:[#allocation7 + $0x168] sm:$0xff]
    %v405 = vld [vmem:[#allocation7 + $0x170] sm:$0xff]
    %v406 = vld [vmem:[#allocation7 + $0x178] sm:$0xff]
    %v407 = vld [vmem:[#allocation7 + $0x180] sm:$0xff]
    %v408 = vld [vmem:[#allocation7 + $0x188] sm:$0xff]
    %v409 = vld [vmem:[#allocation7 + $0x190] sm:$0xff]
    %v410 = vld [vmem:[#allocation7 + $0x198] sm:$0xff]
    %v411 = vld [vmem:[#allocation7 + $0x1a0] sm:$0xff]
    %v412 = vld [vmem:[#allocation7 + $0x1a8] sm:$0xff]
    %v413 = vld [vmem:[#allocation7 + $0x1b0] sm:$0xff]
    %v414 = vld [vmem:[#allocation7 + $0x1b8] sm:$0xff]
    %v415 = vld [vmem:[#allocation7 + $0x1c0] sm:$0xff]
    %v416 = vld [vmem:[#allocation7 + $0x1c8] sm:$0xff]
    %v417 = vld [vmem:[#allocation7 + $0x1d0] sm:$0xff]
    %v418 = vld [vmem:[#allocation7 + $0x1d8] sm:$0xff]
    %v419 = vld [vmem:[#allocation7 + $0x1e0] sm:$0xff]
    %v420 = vld [vmem:[#allocation7 + $0x1e8] sm:$0xff]
    %v421 = vld [vmem:[#allocation7 + $0x1f0] sm:$0xff]
    %v422 = vld [vmem:[#allocation7 + $0x1f8] sm:$0xff]
    %v423 = vld [vmem:[#allocation7 + $0x200] sm:$0xff]
    %v424 = vld [vmem:[#allocation7 + $0x208] sm:$0xff]
    %v425 = vld [vmem:[#allocation7 + $0x210] sm:$0xff]
    %v426 = vld [vmem:[#allocation7 + $0x218] sm:$0xff]
    %v427 = vld [vmem:[#allocation7 + $0x220] sm:$0xff]
    %v428 = vld [vmem:[#allocation7 + $0x228] sm:$0xff]
    %v429 = vld [vmem:[#allocation7 + $0x230] sm:$0xff]
    %v430 = vld [vmem:[#allocation7 + $0x238] sm:$0xff]
    %v431 = vld [vmem:[#allocation7 + $0x240] sm:$0xff]
    %v432 = vld [vmem:[#allocation7 + $0x248] sm:$0xff]
    %v433 = vld [vmem:[#allocation7 + $0x250] sm:$0xff]
    %v434 = vld [vmem:[#allocation7 + $0x258] sm:$0xff]
    %v435 = vld [vmem:[#allocation7 + $0x260] sm:$0xff]
    %v436 = vld [vmem:[#allocation7 + $0x268] sm:$0xff]
    %v437 = vld [vmem:[#allocation7 + $0x270] sm:$0xff]
    %v438 = vld [vmem:[#allocation7 + $0x278] sm:$0xff]
    %v439 = vld [vmem:[#allocation7 + $0x280] sm:$0xff]
    %v440 = vld [vmem:[#allocation7 + $0x288] sm:$0xff]
    %v441 = vld [vmem:[#allocation7 + $0x290] sm:$0xff]
    %v442 = vld [vmem:[#allocation7 + $0x298] sm:$0xff]
    %v443 = vld [vmem:[#allocation7 + $0x2a0] sm:$0xff]
    %v444 = vld [vmem:[#allocation7 + $0x2a8] sm:$0xff]
    %v445 = vld [vmem:[#allocation7 + $0x2b0] sm:$0xff]
    %v446 = vld [vmem:[#allocation7 + $0x2b8] sm:$0xff]
    %v447 = vld [vmem:[#allocation7 + $0x2c0] sm:$0xff]
    %v448 = vld [vmem:[#allocation7 + $0x2c8] sm:$0xff]
    %v449 = vld [vmem:[#allocation7 + $0x2d0] sm:$0xff]
    %v450 = vld [vmem:[#allocation7 + $0x2d8] sm:$0xff]
    %v451 = vld [vmem:[#allocation7 + $0x2e0] sm:$0xff]
    %v452 = vld [vmem:[#allocation7 + $0x2e8] sm:$0xff]
    %v453 = vld [vmem:[#allocation7 + $0x2f0] sm:$0xff]
    %v454 = vld [vmem:[#allocation7 + $0x2f8] sm:$0xff]
    %v455 = vld [vmem:[#allocation7 + $0x300] sm:$0xff]
    %v456 = vld [vmem:[#allocation7 + $0x308] sm:$0xff]
    %v457 = vld [vmem:[#allocation7 + $0x310] sm:$0xff]
    %v458 = vld [vmem:[#allocation7 + $0x318] sm:$0xff]
    %v459 = vld [vmem:[#allocation7 + $0x320] sm:$0xff]
    %v460 = vld [vmem:[#allocation7 + $0x328] sm:$0xff]
    %v461 = vld [vmem:[#allocation7 + $0x330] sm:$0xff]
    %v462 = vld [vmem:[#allocation7 + $0x338] sm:$0xff]
    %v463 = vld [vmem:[#allocation7 + $0x340] sm:$0xff]
    %v464 = vld [vmem:[#allocation7 + $0x348] sm:$0xff]
    %v465 = vld [vmem:[#allocation7 + $0x350] sm:$0xff]
    %v466 = vld [vmem:[#allocation7 + $0x358] sm:$0xff]
    %v467 = vld [vmem:[#allocation7 + $0x360] sm:$0xff]
    %v468 = vld [vmem:[#allocation7 + $0x368] sm:$0xff]
    %v469 = vld [vmem:[#allocation7 + $0x370] sm:$0xff]
    %v470 = vld [vmem:[#allocation7 + $0x378] sm:$0xff]
    %v471 = vld [vmem:[#allocation7 + $0x380] sm:$0xff]
    %v472 = vld [vmem:[#allocation7 + $0x388] sm:$0xff]
    %v473 = vld [vmem:[#allocation7 + $0x390] sm:$0xff]
    %v474 = vld [vmem:[#allocation7 + $0x398] sm:$0xff]
    %v475 = vld [vmem:[#allocation7 + $0x3a0] sm:$0xff]
    %v476 = vld [vmem:[#allocation7 + $0x3a8] sm:$0xff]
    %v477 = vld [vmem:[#allocation7 + $0x3b0] sm:$0xff]
    %v478 = vld [vmem:[#allocation7 + $0x3b8] sm:$0xff]
    %v479 = vld [vmem:[#allocation7 + $0x3c0] sm:$0xff]
    %v480 = vld [vmem:[#allocation7 + $0x3c8] sm:$0xff]
    %v481 = vld [vmem:[#allocation7 + $0x3d0] sm:$0xff]
    %v482 = vld [vmem:[#allocation7 + $0x3d8] sm:$0xff]
    %v483 = vld [vmem:[#allocation7 + $0x3e0] sm:$0xff]
    %v484 = vld [vmem:[#allocation7 + $0x3e8] sm:$0xff]
    %v485 = vld [vmem:[#allocation7 + $0x3f0] sm:$0xff]
    %v486 = vld [vmem:[#allocation7 + $0x3f8] sm:$0xff]
    %487 = vmatprep.subr.mxu0 %v360
    %488 = vmatpush1.msra.mxu0 %v359
    %489 = vmatprep.subr.mxu0 %v364
    %490 = vmatpush1.msra.mxu0 %v363
    %491 = vmatprep.subr.mxu0 %v368
    %492 = vmatpush1.msra.mxu0 %v367
    %493 = vmatprep.subr.mxu0 %v372
    %494 = vmatpush1.msra.mxu0 %v371
    %495 = vmatprep.subr.mxu0 %v376
    %496 = vmatpush1.msra.mxu0 %v375
    %497 = vmatprep.subr.mxu0 %v380
    %498 = vmatpush1.msra.mxu0 %v379
    %499 = vmatprep.subr.mxu0 %v384
    %500 = vmatpush1.msra.mxu0 %v383
    %501 = vmatprep.subr.mxu0 %v388
    %502 = vmatpush1.msra.mxu0 %v387
    %503 = vmatprep.subr.mxu0 %v392
    %504 = vmatpush1.msra.mxu0 %v391
    %505 = vmatprep.subr.mxu0 %v396
    %506 = vmatpush1.msra.mxu0 %v395
    %507 = vmatprep.subr.mxu0 %v400
    %508 = vmatpush1.msra.mxu0 %v399
    %509 = vmatprep.subr.mxu0 %v404
    %510 = vmatpush1.msra.mxu0 %v403
    %511 = vmatprep.subr.mxu0 %v408
    %512 = vmatpush1.msra.mxu0 %v407
    %513 = vmatprep.subr.mxu0 %v412
    %514 = vmatpush1.msra.mxu0 %v411
    %515 = vmatprep.subr.mxu0 %v416
    %516 = vmatpush1.msra.mxu0 %v415
    %517 = vmatprep.subr.mxu0 %v420
    %518 = vmatpush1.msra.mxu0 %v419
    %519 = vmatprep.subr.mxu0 %v424
    %520 = vmatpush1.msra.mxu0 %v423
    %521 = vmatprep.subr.mxu0 %v428
    %522 = vmatpush1.msra.mxu0 %v427
    %523 = vmatprep.subr.mxu0 %v432
    %524 = vmatpush1.msra.mxu0 %v431
    %525 = vmatprep.subr.mxu0 %v436
    %526 = vmatpush1.msra.mxu0 %v435
    %527 = vmatprep.subr.mxu0 %v440
    %528 = vmatpush1.msra.mxu0 %v439
    %529 = vmatprep.subr.mxu0 %v444
    %530 = vmatpush1.msra.mxu0 %v443
    %531 = vmatprep.subr.mxu0 %v448
    %532 = vmatpush1.msra.mxu0 %v447
    %533 = vmatprep.subr.mxu0 %v452
    %534 = vmatpush1.msra.mxu0 %v451
    %535 = vmatprep.subr.mxu0 %v456
    %536 = vmatpush1.msra.mxu0 %v455
    %537 = vmatprep.subr.mxu0 %v460
    %538 = vmatpush1.msra.mxu0 %v459
    %539 = vmatprep.subr.mxu0 %v464
    %540 = vmatpush1.msra.mxu0 %v463
    %541 = vmatprep.subr.mxu0 %v468
    %542 = vmatpush1.msra.mxu0 %v467
    %543 = vmatprep.subr.mxu0 %v472
    %544 = vmatpush1.msra.mxu0 %v471
    %545 = vmatprep.subr.mxu0 %v476
    %546 = vmatpush1.msra.mxu0 %v475
    %547 = vmatprep.subr.mxu0 %v480
    %548 = vmatpush1.msra.mxu0 %v479
    %549 = vmatprep.subr.mxu0 %v484
    %550 = vmatpush1.msra.mxu0 %v483
    %551 = vmatprep.mubr.f32.mxu0 %v80
    %552 = vmatmul.mubr.f32.gmra.mrb[0].mxu0 %v79
    %v553 = vpop.f32.mrb[0].mxu0
    %v554 = vadd.f32 0.0, %v553
    %v555 = vpop.f32.mrb[0].mxu0
    %v556 = vadd.f32 0.0, %v555
    %557 = vmatprep.mubr.f32.mxu0 %v82
    %558 = vmatmul.mubr.f32.gmra.mrb[0].mxu0 %v81
    %v559 = vpop.f32.mrb[0].mxu0
    %v560 = vadd.f32 0.0, %v559
    %v561 = vpop.f32.mrb[0].mxu0
    %v562 = vadd.f32 0.0, %v561
    %563 = vdwg.mxu0
    %564 = vmatprep.subr.mxu0 %v362
    %565 = vmatpush1.msra.mxu0 %v361
    %566 = vmatprep.subr.mxu0 %v366
    %567 = vmatpush1.msra.mxu0 %v365
    %568 = vmatprep.subr.mxu0 %v370
    %569 = vmatpush1.msra.mxu0 %v369
    %570 = vmatprep.subr.mxu0 %v374
    %571 = vmatpush1.msra.mxu0 %v373
    %572 = vmatprep.subr.mxu0 %v378
    %573 = vmatpush1.msra.mxu0 %v377
    %574 = vmatprep.subr.mxu0 %v382
    %575 = vmatpush1.msra.mxu0 %v381
    %576 = vmatprep.subr.mxu0 %v386
    %577 = vmatpush1.msra.mxu0 %v385
    %578 = vmatprep.subr.mxu0 %v390
    %579 = vmatpush1.msra.mxu0 %v389
    %580 = vmatprep.subr.mxu0 %v394
    %581 = vmatpush1.msra.mxu0 %v393
    %582 = vmatprep.subr.mxu0 %v398
    %583 = vmatpush1.msra.mxu0 %v397
    %584 = vmatprep.subr.mxu0 %v402
    %585 = vmatpush1.msra.mxu0 %v401
    %586 = vmatprep.subr.mxu0 %v406
    %587 = vmatpush1.msra.mxu0 %v405
    %588 = vmatprep.subr.mxu0 %v410
    %589 = vmatpush1.msra.mxu0 %v409
    %590 = vmatprep.subr.mxu0 %v414
    %591 = vmatpush1.msra.mxu0 %v413
    %592 = vmatprep.subr.mxu0 %v418
    %593 = vmatpush1.msra.mxu0 %v417
    %594 = vmatprep.subr.mxu0 %v422
    %595 = vmatpush1.msra.mxu0 %v421
    %596 = vmatprep.subr.mxu0 %v426
    %597 = vmatpush1.msra.mxu0 %v425
    %598 = vmatprep.subr.mxu0 %v430
    %599 = vmatpush1.msra.mxu0 %v429
    %600 = vmatprep.subr.mxu0 %v434
    %601 = vmatpush1.msra.mxu0 %v433
    %602 = vmatprep.subr.mxu0 %v438
    %603 = vmatpush1.msra.mxu0 %v437
    %604 = vmatprep.subr.mxu0 %v442
    %605 = vmatpush1.msra.mxu0 %v441
    %606 = vmatprep.subr.mxu0 %v446
    %607 = vmatpush1.msra.mxu0 %v445
    %608 = vmatprep.subr.mxu0 %v450
    %609 = vmatpush1.msra.mxu0 %v449
    %610 = vmatprep.subr.mxu0 %v454
    %611 = vmatpush1.msra.mxu0 %v453
    %612 = vmatprep.subr.mxu0 %v458
    %613 = vmatpush1.msra.mxu0 %v457
    %614 = vmatprep.subr.mxu0 %v462
    %615 = vmatpush1.msra.mxu0 %v461
    %616 = vmatprep.subr.mxu0 %v466
    %617 = vmatpush1.msra.mxu0 %v465
    %618 = vmatprep.subr.mxu0 %v470
    %619 = vmatpush1.msra.mxu0 %v469
    %620 = vmatprep.subr.mxu0 %v474
    %621 = vmatpush1.msra.mxu0 %v473
    %622 = vmatprep.subr.mxu0 %v478
    %623 = vmatpush1.msra.mxu0 %v477
    %624 = vmatprep.subr.mxu0 %v482
    %625 = vmatpush1.msra.mxu0 %v481
    %626 = vmatprep.subr.mxu0 %v486
    %627 = vmatpush1.msra.mxu0 %v485
    %628 = vmatprep.mubr.f32.mxu0 %v80
    %629 = vmatmul.mubr.f32.gmra.mrb[0].mxu0 %v79
    %v630 = vpop.f32.mrb[0].mxu0
    %v631 = vadd.f32 0.0, %v630
    %v632 = vpop.f32.mrb[0].mxu0
    %v633 = vadd.f32 0.0, %v632
    %634 = vmatprep.mubr.f32.mxu0 %v82
    %635 = vmatmul.mubr.f32.gmra.mrb[0].mxu0 %v81
    %v636 = vpop.f32.mrb[0].mxu0
    %v637 = vadd.f32 0.0, %v636
    %v638 = vpop.f32.mrb[0].mxu0
    %v639 = vadd.f32 0.0, %v638
    %640 = vdwg.mxu0
    %v641 = vadd.f32 %v195, %v554
    %v642 = vadd.f32 %v197, %v556
    %v643 = vadd.f32 %v201, %v560
    %v644 = vadd.f32 %v203, %v562
    %v645 = vadd.f32 %v272, %v631
    %v646 = vadd.f32 %v274, %v633
    %v647 = vadd.f32 %v278, %v637
    %v648 = vadd.f32 %v280, %v639
    %v649 = vxor.u32 %v641, 2147483648
    %v650 = vxor.u32 %v642, 2147483648
    %v651 = vxor.u32 %v643, 2147483648
    %v652 = vxor.u32 %v644, 2147483648
    %v653 = vmul.f32 %v649, 1.442695
    %v654 = vpow.pop %v653
    %v655 = vmul.f32 %v650, 1.442695
    %v656 = vpow.pop %v655
    %v657 = vmul.f32 %v651, 1.442695
    %v658 = vpow.pop %v657
    %v659 = vmul.f32 %v652, 1.442695
    %v660 = vpow.pop %v659
    %v661 = vadd.f32 %v654, 1.0
    %v662 = vadd.f32 %v656, 1.0
    %v663 = vadd.f32 %v658, 1.0
    %v664 = vadd.f32 %v660, 1.0
    %v665 = vrcp.pop %v661
    %v666 = vmul.f32 1.0, %v665
    %v667 = vrcp.pop %v662
    %v668 = vmul.f32 1.0, %v667
    %v669 = vrcp.pop %v663
    %v670 = vmul.f32 1.0, %v669
    %v671 = vrcp.pop %v664
    %v672 = vmul.f32 1.0, %v671
    %v673 = vxor.u32 %v645, 2147483648
    %v674 = vxor.u32 %v646, 2147483648
    %v675 = vxor.u32 %v647, 2147483648
    %v676 = vxor.u32 %v648, 2147483648
    %v677 = vmul.f32 %v673, 1.442695
    %v678 = vpow.pop %v677
    %v679 = vmul.f32 %v674, 1.442695
    %v680 = vpow.pop %v679
    %v681 = vmul.f32 %v675, 1.442695
    %v682 = vpow.pop %v681
    %v683 = vmul.f32 %v676, 1.442695
    %v684 = vpow.pop %v683
    %v685 = vadd.f32 %v678, 1.0
    %v686 = vadd.f32 %v680, 1.0
    %v687 = vadd.f32 %v682, 1.0
    %v688 = vadd.f32 %v684, 1.0
    %v689 = vrcp.pop %v685
    %v690 = vmul.f32 1.0, %v689
    %v691 = vrcp.pop %v686
    %v692 = vmul.f32 1.0, %v691
    %v693 = vrcp.pop %v687
    %v694 = vmul.f32 1.0, %v693
    %v695 = vrcp.pop %v688
    %v696 = vmul.f32 1.0, %v695
    %v697 = vmul.f32 %v79, %v690
    %v698 = vmul.f32 %v80, %v692
    %v699 = vmul.f32 %v81, %v694
    %v700 = vmul.f32 %v82, %v696
    %v701 = vld [vmem:[#allocation8] sm:$0xff]
    %v702 = vld [vmem:[#allocation8 + $0x8] sm:$0xff]
    %v703 = vld [vmem:[#allocation8 + $0x10] sm:$0xff]
    %v704 = vld [vmem:[#allocation8 + $0x18] sm:$0xff]
    %v705 = vld [vmem:[#allocation8 + $0x20] sm:$0xff]
    %v706 = vld [vmem:[#allocation8 + $0x28] sm:$0xff]
    %v707 = vld [vmem:[#allocation8 + $0x30] sm:$0xff]
    %v708 = vld [vmem:[#allocation8 + $0x38] sm:$0xff]
    %v709 = vld [vmem:[#allocation8 + $0x40] sm:$0xff]
    %v710 = vld [vmem:[#allocation8 + $0x48] sm:$0xff]
    %v711 = vld [vmem:[#allocation8 + $0x50] sm:$0xff]
    %v712 = vld [vmem:[#allocation8 + $0x58] sm:$0xff]
    %v713 = vld [vmem:[#allocation8 + $0x60] sm:$0xff]
    %v714 = vld [vmem:[#allocation8 + $0x68] sm:$0xff]
    %v715 = vld [vmem:[#allocation8 + $0x70] sm:$0xff]
    %v716 = vld [vmem:[#allocation8 + $0x78] sm:$0xff]
    %v717 = vld [vmem:[#allocation8 + $0x80] sm:$0xff]
    %v718 = vld [vmem:[#allocation8 + $0x88] sm:$0xff]
    %v719 = vld [vmem:[#allocation8 + $0x90] sm:$0xff]
    %v720 = vld [vmem:[#allocation8 + $0x98] sm:$0xff]
    %v721 = vld [vmem:[#allocation8 + $0xa0] sm:$0xff]
    %v722 = vld [vmem:[#allocation8 + $0xa8] sm:$0xff]
    %v723 = vld [vmem:[#allocation8 + $0xb0] sm:$0xff]
    %v724 = vld [vmem:[#allocation8 + $0xb8] sm:$0xff]
    %v725 = vld [vmem:[#allocation8 + $0xc0] sm:$0xff]
    %v726 = vld [vmem:[#allocation8 + $0xc8] sm:$0xff]
    %v727 = vld [vmem:[#allocation8 + $0xd0] sm:$0xff]
    %v728 = vld [vmem:[#allocation8 + $0xd8] sm:$0xff]
    %v729 = vld [vmem:[#allocation8 + $0xe0] sm:$0xff]
    %v730 = vld [vmem:[#allocation8 + $0xe8] sm:$0xff]
    %v731 = vld [vmem:[#allocation8 + $0xf0] sm:$0xff]
    %v732 = vld [vmem:[#allocation8 + $0xf8] sm:$0xff]
    %v733 = vld [vmem:[#allocation8 + $0x100] sm:$0xff]
    %v734 = vld [vmem:[#allocation8 + $0x108] sm:$0xff]
    %v735 = vld [vmem:[#allocation8 + $0x110] sm:$0xff]
    %v736 = vld [vmem:[#allocation8 + $0x118] sm:$0xff]
    %v737 = vld [vmem:[#allocation8 + $0x120] sm:$0xff]
    %v738 = vld [vmem:[#allocation8 + $0x128] sm:$0xff]
    %v739 = vld [vmem:[#allocation8 + $0x130] sm:$0xff]
    %v740 = vld [vmem:[#allocation8 + $0x138] sm:$0xff]
    %v741 = vld [vmem:[#allocation8 + $0x140] sm:$0xff]
    %v742 = vld [vmem:[#allocation8 + $0x148] sm:$0xff]
    %v743 = vld [vmem:[#allocation8 + $0x150] sm:$0xff]
    %v744 = vld [vmem:[#allocation8 + $0x158] sm:$0xff]
    %v745 = vld [vmem:[#allocation8 + $0x160] sm:$0xff]
    %v746 = vld [vmem:[#allocation8 + $0x168] sm:$0xff]
    %v747 = vld [vmem:[#allocation8 + $0x170] sm:$0xff]
    %v748 = vld [vmem:[#allocation8 + $0x178] sm:$0xff]
    %v749 = vld [vmem:[#allocation8 + $0x180] sm:$0xff]
    %v750 = vld [vmem:[#allocation8 + $0x188] sm:$0xff]
    %v751 = vld [vmem:[#allocation8 + $0x190] sm:$0xff]
    %v752 = vld [vmem:[#allocation8 + $0x198] sm:$0xff]
    %v753 = vld [vmem:[#allocation8 + $0x1a0] sm:$0xff]
    %v754 = vld [vmem:[#allocation8 + $0x1a8] sm:$0xff]
    %v755 = vld [vmem:[#allocation8 + $0x1b0] sm:$0xff]
    %v756 = vld [vmem:[#allocation8 + $0x1b8] sm:$0xff]
    %v757 = vld [vmem:[#allocation8 + $0x1c0] sm:$0xff]
    %v758 = vld [vmem:[#allocation8 + $0x1c8] sm:$0xff]
    %v759 = vld [vmem:[#allocation8 + $0x1d0] sm:$0xff]
    %v760 = vld [vmem:[#allocation8 + $0x1d8] sm:$0xff]
    %v761 = vld [vmem:[#allocation8 + $0x1e0] sm:$0xff]
    %v762 = vld [vmem:[#allocation8 + $0x1e8] sm:$0xff]
    %v763 = vld [vmem:[#allocation8 + $0x1f0] sm:$0xff]
    %v764 = vld [vmem:[#allocation8 + $0x1f8] sm:$0xff]
    %765 = vmatprep.subr.mxu0 %v702
    %766 = vmatpush1.msra.mxu0 %v701
    %767 = vmatprep.subr.mxu0 %v704
    %768 = vmatpush1.msra.mxu0 %v703
    %769 = vmatprep.subr.mxu0 %v706
    %770 = vmatpush1.msra.mxu0 %v705
    %771 = vmatprep.subr.mxu0 %v708
    %772 = vmatpush1.msra.mxu0 %v707
    %773 = vmatprep.subr.mxu0 %v710
    %774 = vmatpush1.msra.mxu0 %v709
    %775 = vmatprep.subr.mxu0 %v712
    %776 = vmatpush1.msra.mxu0 %v711
    %777 = vmatprep.subr.mxu0 %v714
    %778 = vmatpush1.msra.mxu0 %v713
    %779 = vmatprep.subr.mxu0 %v716
    %780 = vmatpush1.msra.mxu0 %v715
    %781 = vmatprep.subr.mxu0 %v718
    %782 = vmatpush1.msra.mxu0 %v717
    %783 = vmatprep.subr.mxu0 %v720
    %784 = vmatpush1.msra.mxu0 %v719
    %785 = vmatprep.subr.mxu0 %v722
    %786 = vmatpush1.msra.mxu0 %v721
    %787 = vmatprep.subr.mxu0 %v724
    %788 = vmatpush1.msra.mxu0 %v723
    %789 = vmatprep.subr.mxu0 %v726
    %790 = vmatpush1.msra.mxu0 %v725
    %791 = vmatprep.subr.mxu0 %v728
    %792 = vmatpush1.msra.mxu0 %v727
    %793 = vmatprep.subr.mxu0 %v730
    %794 = vmatpush1.msra.mxu0 %v729
    %795 = vmatprep.subr.mxu0 %v732
    %796 = vmatpush1.msra.mxu0 %v731
    %797 = vmatprep.subr.mxu0 %v734
    %798 = vmatpush1.msra.mxu0 %v733
    %799 = vmatprep.subr.mxu0 %v736
    %800 = vmatpush1.msra.mxu0 %v735
    %801 = vmatprep.subr.mxu0 %v738
    %802 = vmatpush1.msra.mxu0 %v737
    %803 = vmatprep.subr.mxu0 %v740
    %804 = vmatpush1.msra.mxu0 %v739
    %805 = vmatprep.subr.mxu0 %v742
    %806 = vmatpush1.msra.mxu0 %v741
    %807 = vmatprep.subr.mxu0 %v744
    %808 = vmatpush1.msra.mxu0 %v743
    %809 = vmatprep.subr.mxu0 %v746
    %810 = vmatpush1.msra.mxu0 %v745
    %811 = vmatprep.subr.mxu0 %v748
    %812 = vmatpush1.msra.mxu0 %v747
    %813 = vmatprep.subr.mxu0 %v750
    %814 = vmatpush1.msra.mxu0 %v749
    %815 = vmatprep.subr.mxu0 %v752
    %816 = vmatpush1.msra.mxu0 %v751
    %817 = vmatprep.subr.mxu0 %v754
    %818 = vmatpush1.msra.mxu0 %v753
    %819 = vmatprep.subr.mxu0 %v756
    %820 = vmatpush1.msra.mxu0 %v755
    %821 = vmatprep.subr.mxu0 %v758
    %822 = vmatpush1.msra.mxu0 %v757
    %823 = vmatprep.subr.mxu0 %v760
    %824 = vmatpush1.msra.mxu0 %v759
    %825 = vmatprep.subr.mxu0 %v762
    %826 = vmatpush1.msra.mxu0 %v761
    %827 = vmatprep.subr.mxu0 %v764
    %828 = vmatpush1.msra.mxu0 %v763
    %829 = vmatprep.mubr.f32.mxu0 %v698
    %830 = vmatmul.mubr.f32.gmra.mrb[0].mxu0 %v697
    %v831 = vpop.f32.mrb[0].mxu0
    %v832 = vadd.f32 0.0, %v831
    %v833 = vpop.f32.mrb[0].mxu0
    %v834 = vadd.f32 0.0, %v833
    %835 = vmatprep.mubr.f32.mxu0 %v700
    %836 = vmatmul.mubr.f32.gmra.mrb[0].mxu0 %v699
    %v837 = vpop.f32.mrb[0].mxu0
    %v838 = vadd.f32 0.0, %v837
    %v839 = vpop.f32.mrb[0].mxu0
    %v840 = vadd.f32 0.0, %v839
    %841 = vdwg.mxu0
    %v842 = vadd.f32 %v349, %v832
    %v843 = vadd.f32 %v351, %v834
    %v844 = vadd.f32 %v355, %v838
    %v845 = vadd.f32 %v357, %v840
    %v846 = vtanh.pop %v842
    %v847 = vtanh.pop %v843
    %v848 = vtanh.pop %v844
    %v849 = vtanh.pop %v845
    %v850 = vsub.f32 1.0, %v666
    %v851 = vsub.f32 1.0, %v668
    %v852 = vsub.f32 1.0, %v670
    %v853 = vsub.f32 1.0, %v672
    %v854 = vmul.f32 %v79, %v850
    %v855 = vmul.f32 %v80, %v851
    %v856 = vmul.f32 %v81, %v852
    %v857 = vmul.f32 %v82, %v853
    %v858 = vmul.f32 %v846, %v666
    %v859 = vmul.f32 %v847, %v668
    %v860 = vmul.f32 %v848, %v670
    %v861 = vmul.f32 %v849, %v672
    %v862 = vadd.f32 %v854, %v858
    %v863 = vadd.f32 %v855, %v859
    %v864 = vadd.f32 %v856, %v860
    %v865 = vadd.f32 %v857, %v861
    %866 = vst [vmem:[#allocation10] sm:$0xff] %v862
    %867 = vst [vmem:[#allocation10 + $0x8] sm:$0xff] %v863
    %868 = vst [vmem:[#allocation10 + $0x10] sm:$0xff] %v864
    %869 = vst [vmem:[#allocation10 + $0x18] sm:$0xff] %v865
    // Predicated region
    $region42: #{tpu_custom_call.1} parent=1 // pred_check
      _
    $region43: #{tpu_custom_call.1} parent=1 // pred_check_branch
      %871 = sbr.rel (0) target = $region45
    $region44: #{tpu_custom_call.1} parent=1 // pred_region
      %s873 = ssub.s32 512, 512
      %874 = vsyncadd [#allocation4], %s873
      %s875 = sshll.u32 [#allocation10], 4
      %s876 = int_to_ptr.vmem [resolvable:$true] %s875
      %881 = dma.vmem_to_hbm [thread:$0]  %s876, 512, %s6, [#allocation4], 256, 256, 16
    $region45: #{tpu_custom_call.1} parent=1 // pred_fallthru
      _
    // Predicated region
    $region46: #{tpu_custom_call.1} parent=1 // pred_check
      _
    $region47: #{tpu_custom_call.1} parent=1 // pred_check_branch
      %883 = sbr.rel (0) target = $region49
    $region48: #{tpu_custom_call.1} parent=1 // pred_region
      %884 = dma.done [#allocation4], 512
    $region49: #{tpu_custom_call.1} parent=1 // pred_fallthru
      _
    %885 = vsyncpa [#allocation3], 1
    %886 = vsyncpa [#allocation6], 1
    %887 = vsyncpa [#allocation9], 1
    %888 = vsyncpa [#allocation4], 1

</llo_original>
